<compile_context>
chip_gen: v7x
topology: tpu7x:2x2x1
jax: 0.10.0
libtpu: 0.0.40
codegen_flags: <defaults>
</compile_context>

<pallas_src>
import jax
import jax.numpy as jnp
from jax import lax
from jax.experimental import pallas as pl
from jax.experimental.pallas import tpu as pltpu


def _round_up(n, m):
    return ((n + m - 1) // m) * m


def _tap_masks(hp, wp):
    """(9, hp*wp) float32 0/1 masks: in-bounds pixels for each 3x3 tap."""
    ii = jnp.arange(hp)
    jj = jnp.arange(wp)
    rows = []
    for di in range(3):
        for dj in range(3):
            a, b = di - 1, dj - 1
            vi = (ii + a >= 0) & (ii + a < hp)
            vj = (jj + b >= 0) & (jj + b < wp)
            rows.append((vi[:, None] & vj[None, :]).reshape(hp * wp))
    return jnp.stack(rows, axis=0).astype(jnp.float32)


def _make_down_kernel(wp, lane):
    """Down kernel for pooled row width `wp` and lane-group length `lane`."""
    # Tap (di,dj) needs pixel p + (di-1)*wp + (dj-1);  y[l] = x[l + shift]
    # is jnp.roll/pltpu.roll by -shift.  Wrapped lanes are zeroed by masks.
    amounts = [((1 - di) * wp + (1 - dj)) % lane
               for di in range(3) for dj in range(3)]

    def kernel(x_ref, m_ref, w1_ref, b1_ref, w2_ref, b2_ref, o_ref):
        # x_ref : (1, CinP, L)    lane-packed pooled input (compute dtype)
        # m_ref : (9, L)          f32 0/1 tap-validity masks (per lane)
        # w*_ref: (9, CoP, CiP)   per-tap conv weights, BN scale folded
        # b*_ref: (CoP, 1)        f32 folded BN shift
        # o_ref : (1, CoutP, L)   f32
        mvals = m_ref[...]                                    # (9, L) f32

        def conv3x3_bn_relu(xin_f32, w_ref, b_ref):
            wdt = w_ref.dtype
            acc = None
            for t in range(9):
                amt = amounts[t]
                xt = xin_f32 if amt == 0 else pltpu.roll(xin_f32, amt, axis=1)
                if t != 4:                       # centre-tap mask is all-ones
                    xt = xt * mvals[t:t + 1]
                p = jnp.dot(w_ref[t], xt.astype(wdt),
                            preferred_element_type=jnp.float32)
                acc = p if acc is None else acc + p
            return jnp.maximum(acc + b_ref[...], 0.0)         # BN shift+ReLU

        x0 = x_ref[0].astype(jnp.float32)                     # (CinP, L)
        y1 = conv3x3_bn_relu(x0, w1_ref, b1_ref)              # (CmidP, L)
        y2 = conv3x3_bn_relu(y1, w2_ref, b2_ref)              # (CoutP, L)
        o_ref[0] = y2.astype(o_ref.dtype)

    return kernel


def make_down(w1_oihw, w2_oihw, bn1, bn2, eps=1e-5,
              compute_dtype=jnp.float32):
    """Builds Down.forward (eval-mode BN).  Returns a jitted apply(x_nchw)."""
    Cmid, Cin = w1_oihw.shape[:2]
    Cout = w2_oihw.shape[0]
    CinP, CmidP, CoutP = (_round_up(c, 8) for c in (Cin, Cmid, Cout))

    # ---- one-time parameter folding (hoisted out of the per-call path) ----
    g1, be1, mu1, v1 = (jnp.asarray(p, jnp.float32) for p in bn1)
    g2, be2, mu2, v2 = (jnp.asarray(p, jnp.float32) for p in bn2)
    s1 = g1 * lax.rsqrt(v1 + eps)
    s2 = g2 * lax.rsqrt(v2 + eps)

    w1p = jnp.pad(jnp.asarray(w1_oihw, jnp.float32) * s1[:, None, None, None],
                  ((0, CmidP - Cmid), (0, CinP - Cin), (0, 0), (0, 0)))
    w2p = jnp.pad(jnp.asarray(w2_oihw, jnp.float32) * s2[:, None, None, None],
                  ((0, CoutP - Cout), (0, CmidP - Cmid), (0, 0), (0, 0)))
    # (O,I,3,3) -> (3,3,O,I) -> (9,O,I); tap index t = di*3 + dj.
    w1t = jnp.transpose(w1p, (2, 3, 0, 1)).reshape(9, CmidP, CinP)
    w2t = jnp.transpose(w2p, (2, 3, 0, 1)).reshape(9, CoutP, CmidP)
    w1t = w1t.astype(compute_dtype)
    w2t = w2t.astype(compute_dtype)
    b1 = jnp.pad(be1 - mu1 * s1, (0, CmidP - Cmid)).reshape(CmidP, 1)
    b2 = jnp.pad(be2 - mu2 * s2, (0, CoutP - Cout)).reshape(CoutP, 1)

    @jax.jit
    def apply(x_nchw):
        B, C, H, W = x_nchw.shape
        assert C == Cin, (C, Cin)
        Hp, Wp = H // 2, W // 2
        S = Hp * Wp

        # MaxPool2d(2) (floor behaviour), spatial flattened onto lanes.
        x = x_nchw.astype(jnp.float32)[:, :, :2 * Hp, :2 * Wp]
        xp = x.reshape(B, Cin, Hp, 2, Wp, 2).max(axis=(3, 5)).reshape(B, Cin, S)
        if CinP != Cin:
            xp = jnp.pad(xp, ((0, 0), (0, CinP - Cin), (0, 0)))

        # Pack images into lane groups of >= 128 lanes (lane-dense layout).
        bg = B
        for d in range(1, B + 1):
            if B % d == 0 and d * S >= 128:
                bg = d
                break
        G, L = B // bg, bg * S
        xg = (xp.reshape(G, bg, CinP, S).transpose(0, 2, 1, 3)
                .reshape(G, CinP, L).astype(compute_dtype))
        masks = jnp.tile(_tap_masks(Hp, Wp), (1, bg))          # (9, L) f32

        nb = jnp.dtype(compute_dtype).itemsize
        flops = 2 * 9 * (CinP * CmidP + CmidP * CoutP) * G * L
        bytes_accessed = (nb * (G * CinP * L + 9 * (CmidP * CinP + CoutP * CmidP))
                          + 4 * (9 * L + CmidP + CoutP + G * CoutP * L))

        out = pl.pallas_call(
            _make_down_kernel(Wp, L),
            out_shape=jax.ShapeDtypeStruct((G, CoutP, L), jnp.float32),
            grid_spec=pltpu.PrefetchScalarGridSpec(
                num_scalar_prefetch=0,
                grid=(G,),
                in_specs=[
                    pl.BlockSpec((1, CinP, L), lambda g: (g, 0, 0)),
                    pl.BlockSpec((9, L), lambda g: (0, 0)),
                    pl.BlockSpec((9, CmidP, CinP), lambda g: (0, 0, 0)),
                    pl.BlockSpec((CmidP, 1), lambda g: (0, 0)),
                    pl.BlockSpec((9, CoutP, CmidP), lambda g: (0, 0, 0)),
                    pl.BlockSpec((CoutP, 1), lambda g: (0, 0)),
                ],
                out_specs=pl.BlockSpec((1, CoutP, L), lambda g: (g, 0, 0)),
            ),
            compiler_params=pltpu.CompilerParams(
                dimension_semantics=("parallel",),
                vmem_limit_bytes=32 * 1024 * 1024),
            cost_estimate=pl.CostEstimate(flops=flops, transcendentals=0,
                                          bytes_accessed=bytes_accessed),
        )(xg, masks, w1t, b1, w2t, b2)

        # Un-pack lane groups back to NCHW (a no-op when bg == 1; for the
        # tiny-image bg>1 corner it is a few-KiB fused XLA transpose).
        y = (out.reshape(G, CoutP, bg, S).transpose(0, 2, 1, 3)
                .reshape(B, CoutP, Hp, Wp))
        return y[:, :Cout]

    return apply


def _ref_down(x_nchw, w1_oihw, w2_oihw, bn1, bn2, eps=1e-5):
    """Pure-JAX reference (eval-mode BatchNorm)."""
    x = jnp.transpose(x_nchw, (0, 2, 3, 1)).astype(jnp.float32)
    B, H, W, Cin = x.shape
    xp = x.reshape(B, H // 2, 2, W // 2, 2, Cin).max(axis=(2, 4))

    def block(z, w_oihw, bn):
        g, bta, mu, var = bn
        w = jnp.transpose(w_oihw, (2, 3, 1, 0))
        y = lax.conv_general_dilated(
            z, w, (1, 1), 'SAME',
            dimension_numbers=('NHWC', 'HWIO', 'NHWC'))
        y = (y - mu) * (g * lax.rsqrt(var + eps)) + bta
        return jnp.maximum(y, 0.0)

    y = block(xp, w1_oihw, bn1)
    y = block(y, w2_oihw, bn2)
    return jnp.transpose(y, (0, 3, 1, 2))


if __name__ == "__main__":
    # Down(in_channels=4, out_channels=8), input (B=2, C=4, H=16, W=16)
    B, Cin, H, W = 2, 4, 16, 16
    Cmid = Cout = 8

    key = jax.random.PRNGKey(0)
    keys = jax.random.split(key, 10)
    x = jax.random.normal(keys[0], (B, Cin, H, W), jnp.float32)

    # conv weights in PyTorch OIHW layout (bias=False)
    w1 = jax.random.normal(keys[1], (Cmid, Cin, 3, 3), jnp.float32) * 0.1
    w2 = jax.random.normal(keys[2], (Cout, Cmid, 3, 3), jnp.float32) * 0.1

    # BatchNorm params: (gamma, beta, running_mean, running_var)
    bn1 = (jax.random.uniform(keys[3], (Cmid,), jnp.float32, 0.5, 1.5),
           jax.random.normal(keys[4], (Cmid,), jnp.float32) * 0.1,
           jax.random.normal(keys[5], (Cmid,), jnp.float32) * 0.1,
           jax.random.uniform(keys[6], (Cmid,), jnp.float32, 0.5, 1.5))
    bn2 = (jax.random.uniform(keys[7], (Cout,), jnp.float32, 0.5, 1.5),
           jax.random.normal(keys[8], (Cout,), jnp.float32) * 0.1,
           jax.random.normal(keys[9], (Cout,), jnp.float32) * 0.1,
           jnp.ones((Cout,), jnp.float32))

    ref = jax.block_until_ready(_ref_down(x, w1, w2, bn1, bn2))

    # f32 compute path: tight tolerance against the eval-mode reference.
    down_f32 = make_down(w1, w2, bn1, bn2, compute_dtype=jnp.float32)
    out = jax.block_until_ready(down_f32(x))
    assert out.shape == (B, Cout, H // 2, W // 2), out.shape
    assert jnp.allclose(out, ref, atol=1e-4, rtol=1e-4), \
        float(jnp.max(jnp.abs(out - ref)))

    # bf16 compute path (bf16 HBM/DMA + bf16 MXU, f32 accumulation): bf16
    # input/weight rounding dominates the error, so the tolerance is looser.
    down_bf16 = make_down(w1, w2, bn1, bn2, compute_dtype=jnp.bfloat16)
    out16 = jax.block_until_ready(down_bf16(x))
    assert out16.shape == (B, Cout, H // 2, W // 2), out16.shape
    assert jnp.allclose(out16, ref, atol=5e-2, rtol=5e-2), \
        float(jnp.max(jnp.abs(out16 - ref)))

    print("KERNEL_OK")
</pallas_src>

<mosaic_0001>
module attributes {stable_mosaic.version = 11 : i64} {
  func.func @kernel(%arg0: i32, %arg1: memref<1x8x128xf32, #tpu.memory_space<vmem>>, %arg2: memref<9x128xf32, #tpu.memory_space<vmem>>, %arg3: memref<9x8x8xf32, #tpu.memory_space<vmem>>, %arg4: memref<8x1xf32, #tpu.memory_space<vmem>>, %arg5: memref<9x8x8xf32, #tpu.memory_space<vmem>>, %arg6: memref<8x1xf32, #tpu.memory_space<vmem>>, %arg7: memref<1x8x128xf32, #tpu.memory_space<vmem>>) attributes {dimension_semantics = [#tpu.dimension_semantics<parallel>], iteration_bounds = array<i64: 1>, scalar_prefetch = 0 : i64, scratch_operands = 0 : i64, tpu.core_type = #tpu.core_type<tc>, window_params = [{transform_indices = @transform_0, window_bounds = array<i64: 1, 8, 128>}, {pipeline_mode = #tpu.pipeline_mode<synchronous>, transform_indices = @transform_1, window_bounds = array<i64: 9, 128>}, {pipeline_mode = #tpu.pipeline_mode<synchronous>, transform_indices = @transform_2, window_bounds = array<i64: 9, 8, 8>}, {pipeline_mode = #tpu.pipeline_mode<synchronous>, transform_indices = @transform_3, window_bounds = array<i64: 8, 1>}, {pipeline_mode = #tpu.pipeline_mode<synchronous>, transform_indices = @transform_4, window_bounds = array<i64: 9, 8, 8>}, {pipeline_mode = #tpu.pipeline_mode<synchronous>, transform_indices = @transform_5, window_bounds = array<i64: 8, 1>}, {transform_indices = @transform_6, window_bounds = array<i64: 1, 8, 128>}]} {
    %c0 = arith.constant 0 : index
    %c0_0 = arith.constant 0 : index
    %0 = vector.load %arg2[%c0, %c0_0] : memref<9x128xf32, #tpu.memory_space<vmem>>, vector<9x128xf32>
    %c0_1 = arith.constant 0 : index
    %c0_2 = arith.constant 0 : index
    %c0_3 = arith.constant 0 : index
    %1 = vector.load %arg1[%c0_1, %c0_2, %c0_3] : memref<1x8x128xf32, #tpu.memory_space<vmem>>, vector<1x8x128xf32>
    %2 = vector.shape_cast %1 : vector<1x8x128xf32> to vector<8x128xf32>
    %c9_i32 = arith.constant 9 : i32
    %3 = tpu.dynamic_rotate %2 by %c9_i32 dim 1 : vector<8x128xf32>, i32 -> vector<8x128xf32>
    %4 = vector.extract_strided_slice %0 {offsets = [0, 0], sizes = [1, 128], strides = [1, 1]} : vector<9x128xf32> to vector<1x128xf32>
    %5 = vector.broadcast %4 : vector<1x128xf32> to vector<8x128xf32>
    %6 = arith.mulf %3, %5 : vector<8x128xf32>
    %c0_4 = arith.constant 0 : index
    %c0_5 = arith.constant 0 : index
    %c0_6 = arith.constant 0 : index
    %7 = vector.load %arg3[%c0_4, %c0_5, %c0_6] : memref<9x8x8xf32, #tpu.memory_space<vmem>>, vector<1x8x8xf32>
    %8 = vector.shape_cast %7 : vector<1x8x8xf32> to vector<8x8xf32>
    %cst = arith.constant dense<0.000000e+00> : vector<8x128xf32>
    %9 = tpu.matmul %8, %6, %cst {dimension_numbers = #tpu.dot_dimension_numbers<[1], [0], [0], [1], [0, 0, 1, 1], [], []>} : vector<8x8xf32>, vector<8x128xf32>, vector<8x128xf32> -> vector<8x128xf32>
    %c8_i32 = arith.constant 8 : i32
    %10 = tpu.dynamic_rotate %2 by %c8_i32 dim 1 : vector<8x128xf32>, i32 -> vector<8x128xf32>
    %11 = vector.extract_strided_slice %0 {offsets = [1, 0], sizes = [1, 128], strides = [1, 1]} : vector<9x128xf32> to vector<1x128xf32>
    %12 = vector.broadcast %11 : vector<1x128xf32> to vector<8x128xf32>
    %13 = arith.mulf %10, %12 : vector<8x128xf32>
    %c1 = arith.constant 1 : index
    %c0_7 = arith.constant 0 : index
    %c0_8 = arith.constant 0 : index
    %14 = vector.load %arg3[%c1, %c0_7, %c0_8] : memref<9x8x8xf32, #tpu.memory_space<vmem>>, vector<1x8x8xf32>
    %15 = vector.shape_cast %14 : vector<1x8x8xf32> to vector<8x8xf32>
    %cst_9 = arith.constant dense<0.000000e+00> : vector<8x128xf32>
    %16 = tpu.matmul %15, %13, %cst_9 {dimension_numbers = #tpu.dot_dimension_numbers<[1], [0], [0], [1], [0, 0, 1, 1], [], []>} : vector<8x8xf32>, vector<8x128xf32>, vector<8x128xf32> -> vector<8x128xf32>
    %17 = arith.addf %9, %16 : vector<8x128xf32>
    %c7_i32 = arith.constant 7 : i32
    %18 = tpu.dynamic_rotate %2 by %c7_i32 dim 1 : vector<8x128xf32>, i32 -> vector<8x128xf32>
    %19 = vector.extract_strided_slice %0 {offsets = [2, 0], sizes = [1, 128], strides = [1, 1]} : vector<9x128xf32> to vector<1x128xf32>
    %20 = vector.broadcast %19 : vector<1x128xf32> to vector<8x128xf32>
    %21 = arith.mulf %18, %20 : vector<8x128xf32>
    %c2 = arith.constant 2 : index
    %c0_10 = arith.constant 0 : index
    %c0_11 = arith.constant 0 : index
    %22 = vector.load %arg3[%c2, %c0_10, %c0_11] : memref<9x8x8xf32, #tpu.memory_space<vmem>>, vector<1x8x8xf32>
    %23 = vector.shape_cast %22 : vector<1x8x8xf32> to vector<8x8xf32>
    %cst_12 = arith.constant dense<0.000000e+00> : vector<8x128xf32>
    %24 = tpu.matmul %23, %21, %cst_12 {dimension_numbers = #tpu.dot_dimension_numbers<[1], [0], [0], [1], [0, 0, 1, 1], [], []>} : vector<8x8xf32>, vector<8x128xf32>, vector<8x128xf32> -> vector<8x128xf32>
    %25 = arith.addf %17, %24 : vector<8x128xf32>
    %c1_i32 = arith.constant 1 : i32
    %26 = tpu.dynamic_rotate %2 by %c1_i32 dim 1 : vector<8x128xf32>, i32 -> vector<8x128xf32>
    %27 = vector.extract_strided_slice %0 {offsets = [3, 0], sizes = [1, 128], strides = [1, 1]} : vector<9x128xf32> to vector<1x128xf32>
    %28 = vector.broadcast %27 : vector<1x128xf32> to vector<8x128xf32>
    %29 = arith.mulf %26, %28 : vector<8x128xf32>
    %c3 = arith.constant 3 : index
    %c0_13 = arith.constant 0 : index
    %c0_14 = arith.constant 0 : index
    %30 = vector.load %arg3[%c3, %c0_13, %c0_14] : memref<9x8x8xf32, #tpu.memory_space<vmem>>, vector<1x8x8xf32>
    %31 = vector.shape_cast %30 : vector<1x8x8xf32> to vector<8x8xf32>
    %cst_15 = arith.constant dense<0.000000e+00> : vector<8x128xf32>
    %32 = tpu.matmul %31, %29, %cst_15 {dimension_numbers = #tpu.dot_dimension_numbers<[1], [0], [0], [1], [0, 0, 1, 1], [], []>} : vector<8x8xf32>, vector<8x128xf32>, vector<8x128xf32> -> vector<8x128xf32>
    %33 = arith.addf %25, %32 : vector<8x128xf32>
    %c4 = arith.constant 4 : index
    %c0_16 = arith.constant 0 : index
    %c0_17 = arith.constant 0 : index
    %34 = vector.load %arg3[%c4, %c0_16, %c0_17] : memref<9x8x8xf32, #tpu.memory_space<vmem>>, vector<1x8x8xf32>
    %35 = vector.shape_cast %34 : vector<1x8x8xf32> to vector<8x8xf32>
    %cst_18 = arith.constant dense<0.000000e+00> : vector<8x128xf32>
    %36 = tpu.matmul %35, %2, %cst_18 {dimension_numbers = #tpu.dot_dimension_numbers<[1], [0], [0], [1], [0, 0, 1, 1], [], []>} : vector<8x8xf32>, vector<8x128xf32>, vector<8x128xf32> -> vector<8x128xf32>
    %37 = arith.addf %33, %36 : vector<8x128xf32>
    %c127_i32 = arith.constant 127 : i32
    %38 = tpu.dynamic_rotate %2 by %c127_i32 dim 1 : vector<8x128xf32>, i32 -> vector<8x128xf32>
    %39 = vector.extract_strided_slice %0 {offsets = [5, 0], sizes = [1, 128], strides = [1, 1]} : vector<9x128xf32> to vector<1x128xf32>
    %40 = vector.broadcast %39 : vector<1x128xf32> to vector<8x128xf32>
    %41 = arith.mulf %38, %40 : vector<8x128xf32>
    %c5 = arith.constant 5 : index
    %c0_19 = arith.constant 0 : index
    %c0_20 = arith.constant 0 : index
    %42 = vector.load %arg3[%c5, %c0_19, %c0_20] : memref<9x8x8xf32, #tpu.memory_space<vmem>>, vector<1x8x8xf32>
    %43 = vector.shape_cast %42 : vector<1x8x8xf32> to vector<8x8xf32>
    %cst_21 = arith.constant dense<0.000000e+00> : vector<8x128xf32>
    %44 = tpu.matmul %43, %41, %cst_21 {dimension_numbers = #tpu.dot_dimension_numbers<[1], [0], [0], [1], [0, 0, 1, 1], [], []>} : vector<8x8xf32>, vector<8x128xf32>, vector<8x128xf32> -> vector<8x128xf32>
    %45 = arith.addf %37, %44 : vector<8x128xf32>
    %c121_i32 = arith.constant 121 : i32
    %46 = tpu.dynamic_rotate %2 by %c121_i32 dim 1 : vector<8x128xf32>, i32 -> vector<8x128xf32>
    %47 = vector.extract_strided_slice %0 {offsets = [6, 0], sizes = [1, 128], strides = [1, 1]} : vector<9x128xf32> to vector<1x128xf32>
    %48 = vector.broadcast %47 : vector<1x128xf32> to vector<8x128xf32>
    %49 = arith.mulf %46, %48 : vector<8x128xf32>
    %c6 = arith.constant 6 : index
    %c0_22 = arith.constant 0 : index
    %c0_23 = arith.constant 0 : index
    %50 = vector.load %arg3[%c6, %c0_22, %c0_23] : memref<9x8x8xf32, #tpu.memory_space<vmem>>, vector<1x8x8xf32>
    %51 = vector.shape_cast %50 : vector<1x8x8xf32> to vector<8x8xf32>
    %cst_24 = arith.constant dense<0.000000e+00> : vector<8x128xf32>
    %52 = tpu.matmul %51, %49, %cst_24 {dimension_numbers = #tpu.dot_dimension_numbers<[1], [0], [0], [1], [0, 0, 1, 1], [], []>} : vector<8x8xf32>, vector<8x128xf32>, vector<8x128xf32> -> vector<8x128xf32>
    %53 = arith.addf %45, %52 : vector<8x128xf32>
    %c120_i32 = arith.constant 120 : i32
    %54 = tpu.dynamic_rotate %2 by %c120_i32 dim 1 : vector<8x128xf32>, i32 -> vector<8x128xf32>
    %55 = vector.extract_strided_slice %0 {offsets = [7, 0], sizes = [1, 128], strides = [1, 1]} : vector<9x128xf32> to vector<1x128xf32>
    %56 = vector.broadcast %55 : vector<1x128xf32> to vector<8x128xf32>
    %57 = arith.mulf %54, %56 : vector<8x128xf32>
    %c7 = arith.constant 7 : index
    %c0_25 = arith.constant 0 : index
    %c0_26 = arith.constant 0 : index
    %58 = vector.load %arg3[%c7, %c0_25, %c0_26] : memref<9x8x8xf32, #tpu.memory_space<vmem>>, vector<1x8x8xf32>
    %59 = vector.shape_cast %58 : vector<1x8x8xf32> to vector<8x8xf32>
    %cst_27 = arith.constant dense<0.000000e+00> : vector<8x128xf32>
    %60 = tpu.matmul %59, %57, %cst_27 {dimension_numbers = #tpu.dot_dimension_numbers<[1], [0], [0], [1], [0, 0, 1, 1], [], []>} : vector<8x8xf32>, vector<8x128xf32>, vector<8x128xf32> -> vector<8x128xf32>
    %61 = arith.addf %53, %60 : vector<8x128xf32>
    %c119_i32 = arith.constant 119 : i32
    %62 = tpu.dynamic_rotate %2 by %c119_i32 dim 1 : vector<8x128xf32>, i32 -> vector<8x128xf32>
    %63 = vector.extract_strided_slice %0 {offsets = [8, 0], sizes = [1, 128], strides = [1, 1]} : vector<9x128xf32> to vector<1x128xf32>
    %64 = vector.broadcast %63 : vector<1x128xf32> to vector<8x128xf32>
    %65 = arith.mulf %62, %64 : vector<8x128xf32>
    %c8 = arith.constant 8 : index
    %c0_28 = arith.constant 0 : index
    %c0_29 = arith.constant 0 : index
    %66 = vector.load %arg3[%c8, %c0_28, %c0_29] : memref<9x8x8xf32, #tpu.memory_space<vmem>>, vector<1x8x8xf32>
    %67 = vector.shape_cast %66 : vector<1x8x8xf32> to vector<8x8xf32>
    %cst_30 = arith.constant dense<0.000000e+00> : vector<8x128xf32>
    %68 = tpu.matmul %67, %65, %cst_30 {dimension_numbers = #tpu.dot_dimension_numbers<[1], [0], [0], [1], [0, 0, 1, 1], [], []>} : vector<8x8xf32>, vector<8x128xf32>, vector<8x128xf32> -> vector<8x128xf32>
    %69 = arith.addf %61, %68 : vector<8x128xf32>
    %c0_31 = arith.constant 0 : index
    %c0_32 = arith.constant 0 : index
    %70 = vector.load %arg4[%c0_31, %c0_32] : memref<8x1xf32, #tpu.memory_space<vmem>>, vector<8x1xf32>
    %71 = vector.broadcast %70 : vector<8x1xf32> to vector<8x128xf32>
    %72 = arith.addf %69, %71 : vector<8x128xf32>
    %cst_33 = arith.constant 0.000000e+00 : f32
    %73 = vector.broadcast %cst_33 : f32 to vector<8x128xf32>
    %74 = arith.maximumf %72, %73 : vector<8x128xf32>
    %c9_i32_34 = arith.constant 9 : i32
    %75 = tpu.dynamic_rotate %74 by %c9_i32_34 dim 1 : vector<8x128xf32>, i32 -> vector<8x128xf32>
    %76 = vector.extract_strided_slice %0 {offsets = [0, 0], sizes = [1, 128], strides = [1, 1]} : vector<9x128xf32> to vector<1x128xf32>
    %77 = vector.broadcast %76 : vector<1x128xf32> to vector<8x128xf32>
    %78 = arith.mulf %75, %77 : vector<8x128xf32>
    %c0_35 = arith.constant 0 : index
    %c0_36 = arith.constant 0 : index
    %c0_37 = arith.constant 0 : index
    %79 = vector.load %arg5[%c0_35, %c0_36, %c0_37] : memref<9x8x8xf32, #tpu.memory_space<vmem>>, vector<1x8x8xf32>
    %80 = vector.shape_cast %79 : vector<1x8x8xf32> to vector<8x8xf32>
    %cst_38 = arith.constant dense<0.000000e+00> : vector<8x128xf32>
    %81 = tpu.matmul %80, %78, %cst_38 {dimension_numbers = #tpu.dot_dimension_numbers<[1], [0], [0], [1], [0, 0, 1, 1], [], []>} : vector<8x8xf32>, vector<8x128xf32>, vector<8x128xf32> -> vector<8x128xf32>
    %c8_i32_39 = arith.constant 8 : i32
    %82 = tpu.dynamic_rotate %74 by %c8_i32_39 dim 1 : vector<8x128xf32>, i32 -> vector<8x128xf32>
    %83 = vector.extract_strided_slice %0 {offsets = [1, 0], sizes = [1, 128], strides = [1, 1]} : vector<9x128xf32> to vector<1x128xf32>
    %84 = vector.broadcast %83 : vector<1x128xf32> to vector<8x128xf32>
    %85 = arith.mulf %82, %84 : vector<8x128xf32>
    %c1_40 = arith.constant 1 : index
    %c0_41 = arith.constant 0 : index
    %c0_42 = arith.constant 0 : index
    %86 = vector.load %arg5[%c1_40, %c0_41, %c0_42] : memref<9x8x8xf32, #tpu.memory_space<vmem>>, vector<1x8x8xf32>
    %87 = vector.shape_cast %86 : vector<1x8x8xf32> to vector<8x8xf32>
    %cst_43 = arith.constant dense<0.000000e+00> : vector<8x128xf32>
    %88 = tpu.matmul %87, %85, %cst_43 {dimension_numbers = #tpu.dot_dimension_numbers<[1], [0], [0], [1], [0, 0, 1, 1], [], []>} : vector<8x8xf32>, vector<8x128xf32>, vector<8x128xf32> -> vector<8x128xf32>
    %89 = arith.addf %81, %88 : vector<8x128xf32>
    %c7_i32_44 = arith.constant 7 : i32
    %90 = tpu.dynamic_rotate %74 by %c7_i32_44 dim 1 : vector<8x128xf32>, i32 -> vector<8x128xf32>
    %91 = vector.extract_strided_slice %0 {offsets = [2, 0], sizes = [1, 128], strides = [1, 1]} : vector<9x128xf32> to vector<1x128xf32>
    %92 = vector.broadcast %91 : vector<1x128xf32> to vector<8x128xf32>
    %93 = arith.mulf %90, %92 : vector<8x128xf32>
    %c2_45 = arith.constant 2 : index
    %c0_46 = arith.constant 0 : index
    %c0_47 = arith.constant 0 : index
    %94 = vector.load %arg5[%c2_45, %c0_46, %c0_47] : memref<9x8x8xf32, #tpu.memory_space<vmem>>, vector<1x8x8xf32>
    %95 = vector.shape_cast %94 : vector<1x8x8xf32> to vector<8x8xf32>
    %cst_48 = arith.constant dense<0.000000e+00> : vector<8x128xf32>
    %96 = tpu.matmul %95, %93, %cst_48 {dimension_numbers = #tpu.dot_dimension_numbers<[1], [0], [0], [1], [0, 0, 1, 1], [], []>} : vector<8x8xf32>, vector<8x128xf32>, vector<8x128xf32> -> vector<8x128xf32>
    %97 = arith.addf %89, %96 : vector<8x128xf32>
    %c1_i32_49 = arith.constant 1 : i32
    %98 = tpu.dynamic_rotate %74 by %c1_i32_49 dim 1 : vector<8x128xf32>, i32 -> vector<8x128xf32>
    %99 = vector.extract_strided_slice %0 {offsets = [3, 0], sizes = [1, 128], strides = [1, 1]} : vector<9x128xf32> to vector<1x128xf32>
    %100 = vector.broadcast %99 : vector<1x128xf32> to vector<8x128xf32>
    %101 = arith.mulf %98, %100 : vector<8x128xf32>
    %c3_50 = arith.constant 3 : index
    %c0_51 = arith.constant 0 : index
    %c0_52 = arith.constant 0 : index
    %102 = vector.load %arg5[%c3_50, %c0_51, %c0_52] : memref<9x8x8xf32, #tpu.memory_space<vmem>>, vector<1x8x8xf32>
    %103 = vector.shape_cast %102 : vector<1x8x8xf32> to vector<8x8xf32>
    %cst_53 = arith.constant dense<0.000000e+00> : vector<8x128xf32>
    %104 = tpu.matmul %103, %101, %cst_53 {dimension_numbers = #tpu.dot_dimension_numbers<[1], [0], [0], [1], [0, 0, 1, 1], [], []>} : vector<8x8xf32>, vector<8x128xf32>, vector<8x128xf32> -> vector<8x128xf32>
    %105 = arith.addf %97, %104 : vector<8x128xf32>
    %c4_54 = arith.constant 4 : index
    %c0_55 = arith.constant 0 : index
    %c0_56 = arith.constant 0 : index
    %106 = vector.load %arg5[%c4_54, %c0_55, %c0_56] : memref<9x8x8xf32, #tpu.memory_space<vmem>>, vector<1x8x8xf32>
    %107 = vector.shape_cast %106 : vector<1x8x8xf32> to vector<8x8xf32>
    %cst_57 = arith.constant dense<0.000000e+00> : vector<8x128xf32>
    %108 = tpu.matmul %107, %74, %cst_57 {dimension_numbers = #tpu.dot_dimension_numbers<[1], [0], [0], [1], [0, 0, 1, 1], [], []>} : vector<8x8xf32>, vector<8x128xf32>, vector<8x128xf32> -> vector<8x128xf32>
    %109 = arith.addf %105, %108 : vector<8x128xf32>
    %c127_i32_58 = arith.constant 127 : i32
    %110 = tpu.dynamic_rotate %74 by %c127_i32_58 dim 1 : vector<8x128xf32>, i32 -> vector<8x128xf32>
    %111 = vector.extract_strided_slice %0 {offsets = [5, 0], sizes = [1, 128], strides = [1, 1]} : vector<9x128xf32> to vector<1x128xf32>
    %112 = vector.broadcast %111 : vector<1x128xf32> to vector<8x128xf32>
    %113 = arith.mulf %110, %112 : vector<8x128xf32>
    %c5_59 = arith.constant 5 : index
    %c0_60 = arith.constant 0 : index
    %c0_61 = arith.constant 0 : index
    %114 = vector.load %arg5[%c5_59, %c0_60, %c0_61] : memref<9x8x8xf32, #tpu.memory_space<vmem>>, vector<1x8x8xf32>
    %115 = vector.shape_cast %114 : vector<1x8x8xf32> to vector<8x8xf32>
    %cst_62 = arith.constant dense<0.000000e+00> : vector<8x128xf32>
    %116 = tpu.matmul %115, %113, %cst_62 {dimension_numbers = #tpu.dot_dimension_numbers<[1], [0], [0], [1], [0, 0, 1, 1], [], []>} : vector<8x8xf32>, vector<8x128xf32>, vector<8x128xf32> -> vector<8x128xf32>
    %117 = arith.addf %109, %116 : vector<8x128xf32>
    %c121_i32_63 = arith.constant 121 : i32
    %118 = tpu.dynamic_rotate %74 by %c121_i32_63 dim 1 : vector<8x128xf32>, i32 -> vector<8x128xf32>
    %119 = vector.extract_strided_slice %0 {offsets = [6, 0], sizes = [1, 128], strides = [1, 1]} : vector<9x128xf32> to vector<1x128xf32>
    %120 = vector.broadcast %119 : vector<1x128xf32> to vector<8x128xf32>
    %121 = arith.mulf %118, %120 : vector<8x128xf32>
    %c6_64 = arith.constant 6 : index
    %c0_65 = arith.constant 0 : index
    %c0_66 = arith.constant 0 : index
    %122 = vector.load %arg5[%c6_64, %c0_65, %c0_66] : memref<9x8x8xf32, #tpu.memory_space<vmem>>, vector<1x8x8xf32>
    %123 = vector.shape_cast %122 : vector<1x8x8xf32> to vector<8x8xf32>
    %cst_67 = arith.constant dense<0.000000e+00> : vector<8x128xf32>
    %124 = tpu.matmul %123, %121, %cst_67 {dimension_numbers = #tpu.dot_dimension_numbers<[1], [0], [0], [1], [0, 0, 1, 1], [], []>} : vector<8x8xf32>, vector<8x128xf32>, vector<8x128xf32> -> vector<8x128xf32>
    %125 = arith.addf %117, %124 : vector<8x128xf32>
    %c120_i32_68 = arith.constant 120 : i32
    %126 = tpu.dynamic_rotate %74 by %c120_i32_68 dim 1 : vector<8x128xf32>, i32 -> vector<8x128xf32>
    %127 = vector.extract_strided_slice %0 {offsets = [7, 0], sizes = [1, 128], strides = [1, 1]} : vector<9x128xf32> to vector<1x128xf32>
    %128 = vector.broadcast %127 : vector<1x128xf32> to vector<8x128xf32>
    %129 = arith.mulf %126, %128 : vector<8x128xf32>
    %c7_69 = arith.constant 7 : index
    %c0_70 = arith.constant 0 : index
    %c0_71 = arith.constant 0 : index
    %130 = vector.load %arg5[%c7_69, %c0_70, %c0_71] : memref<9x8x8xf32, #tpu.memory_space<vmem>>, vector<1x8x8xf32>
    %131 = vector.shape_cast %130 : vector<1x8x8xf32> to vector<8x8xf32>
    %cst_72 = arith.constant dense<0.000000e+00> : vector<8x128xf32>
    %132 = tpu.matmul %131, %129, %cst_72 {dimension_numbers = #tpu.dot_dimension_numbers<[1], [0], [0], [1], [0, 0, 1, 1], [], []>} : vector<8x8xf32>, vector<8x128xf32>, vector<8x128xf32> -> vector<8x128xf32>
    %133 = arith.addf %125, %132 : vector<8x128xf32>
    %c119_i32_73 = arith.constant 119 : i32
    %134 = tpu.dynamic_rotate %74 by %c119_i32_73 dim 1 : vector<8x128xf32>, i32 -> vector<8x128xf32>
    %135 = vector.extract_strided_slice %0 {offsets = [8, 0], sizes = [1, 128], strides = [1, 1]} : vector<9x128xf32> to vector<1x128xf32>
    %136 = vector.broadcast %135 : vector<1x128xf32> to vector<8x128xf32>
    %137 = arith.mulf %134, %136 : vector<8x128xf32>
    %c8_74 = arith.constant 8 : index
    %c0_75 = arith.constant 0 : index
    %c0_76 = arith.constant 0 : index
    %138 = vector.load %arg5[%c8_74, %c0_75, %c0_76] : memref<9x8x8xf32, #tpu.memory_space<vmem>>, vector<1x8x8xf32>
    %139 = vector.shape_cast %138 : vector<1x8x8xf32> to vector<8x8xf32>
    %cst_77 = arith.constant dense<0.000000e+00> : vector<8x128xf32>
    %140 = tpu.matmul %139, %137, %cst_77 {dimension_numbers = #tpu.dot_dimension_numbers<[1], [0], [0], [1], [0, 0, 1, 1], [], []>} : vector<8x8xf32>, vector<8x128xf32>, vector<8x128xf32> -> vector<8x128xf32>
    %141 = arith.addf %133, %140 : vector<8x128xf32>
    %c0_78 = arith.constant 0 : index
    %c0_79 = arith.constant 0 : index
    %142 = vector.load %arg6[%c0_78, %c0_79] : memref<8x1xf32, #tpu.memory_space<vmem>>, vector<8x1xf32>
    %143 = vector.broadcast %142 : vector<8x1xf32> to vector<8x128xf32>
    %144 = arith.addf %141, %143 : vector<8x128xf32>
    %cst_80 = arith.constant 0.000000e+00 : f32
    %145 = vector.broadcast %cst_80 : f32 to vector<8x128xf32>
    %146 = arith.maximumf %144, %145 : vector<8x128xf32>
    %c0_81 = arith.constant 0 : index
    %c0_82 = arith.constant 0 : index
    %c0_83 = arith.constant 0 : index
    %147 = vector.load %arg7[%c0_81, %c0_82, %c0_83] : memref<1x8x128xf32, #tpu.memory_space<vmem>>, vector<1x8x128xf32>
    %148 = vector.shape_cast %147 : vector<1x8x128xf32> to vector<8x128xf32>
    %149 = vector.shape_cast %146 : vector<8x128xf32> to vector<1x8x128xf32>
    tpu.vector_store %arg7[%c0_81, %c0_82, %c0_83], %149 {strides = array<i32>} : memref<1x8x128xf32, #tpu.memory_space<vmem>>, vector<1x8x128xf32>,
    return
  }
  func.func @transform_0(%arg0: i32) -> (i32, i32, i32) {
    %c0_i32 = arith.constant 0 : i32
    %c0_i32_0 = arith.constant 0 : i32
    %c0_i32_1 = arith.constant 0 : i32
    return %arg0, %c0_i32, %c0_i32_0 : i32, i32, i32
  }
  func.func @transform_1(%arg0: i32) -> (i32, i32) {
    %c0_i32 = arith.constant 0 : i32
    %c0_i32_0 = arith.constant 0 : i32
    %c0_i32_1 = arith.constant 0 : i32
    return %c0_i32, %c0_i32_0 : i32, i32
  }
  func.func @transform_2(%arg0: i32) -> (i32, i32, i32) {
    %c0_i32 = arith.constant 0 : i32
    %c0_i32_0 = arith.constant 0 : i32
    %c0_i32_1 = arith.constant 0 : i32
    %c0_i32_2 = arith.constant 0 : i32
    return %c0_i32, %c0_i32_0, %c0_i32_1 : i32, i32, i32
  }
  func.func @transform_3(%arg0: i32) -> (i32, i32) {
    %c0_i32 = arith.constant 0 : i32
    %c0_i32_0 = arith.constant 0 : i32
    %c0_i32_1 = arith.constant 0 : i32
    return %c0_i32, %c0_i32_0 : i32, i32
  }
  func.func @transform_4(%arg0: i32) -> (i32, i32, i32) {
    %c0_i32 = arith.constant 0 : i32
    %c0_i32_0 = arith.constant 0 : i32
    %c0_i32_1 = arith.constant 0 : i32
    %c0_i32_2 = arith.constant 0 : i32
    return %c0_i32, %c0_i32_0, %c0_i32_1 : i32, i32, i32
  }
  func.func @transform_5(%arg0: i32) -> (i32, i32) {
    %c0_i32 = arith.constant 0 : i32
    %c0_i32_0 = arith.constant 0 : i32
    %c0_i32_1 = arith.constant 0 : i32
    return %c0_i32, %c0_i32_0 : i32, i32
  }
  func.func @transform_6(%arg0: i32) -> (i32, i32, i32) {
    %c0_i32 = arith.constant 0 : i32
    %c0_i32_0 = arith.constant 0 : i32
    %c0_i32_1 = arith.constant 0 : i32
    return %arg0, %c0_i32, %c0_i32_0 : i32, i32, i32
  }
}

</mosaic_0001>

<llo_original>
// kernel: tile.9
$region0: #{tile.9}
  %s0 = inlined_call_operand.vmem [shape: f32[9,2,64], index: 0, kind: input, shape index: {}]
  %s1 = inlined_call_operand.vmem [shape: f32[9,128], index: 1, kind: output, shape index: {}]
  $region1: #{tile.9} parent=0
    #allocation0 [shape = 'u8[36864]{0}', space=vmem, size = 0x9000, scoped, tag = 'scoped mem for input reshape']
    %s3 = sshllo.u32 0, 2
    %s4 = smul.addr 2, 8
    %s5 = scalar_lea.vmem %s0, %s4
    %v6 = vld [vmem:[%s5] sm:%s3]
    %s7 = scalar_lea.vmem [#allocation0], 64
    %8 = vst [vmem:[%s7] sm:%s3] %v6
    %s9 = smul.addr 2, 7
    %s10 = scalar_lea.vmem %s0, %s9
    %v11 = vld [vmem:[%s10] sm:%s3]
    %s12 = scalar_lea.vmem [#allocation0], 56
    %13 = vst [vmem:[%s12] sm:%s3] %v11
    %s14 = smul.addr 2, 6
    %s15 = scalar_lea.vmem %s0, %s14
    %v16 = vld [vmem:[%s15] sm:%s3]
    %s17 = scalar_lea.vmem [#allocation0], 48
    %18 = vst [vmem:[%s17] sm:%s3] %v16
    %s19 = smul.addr 2, 5
    %s20 = scalar_lea.vmem %s0, %s19
    %v21 = vld [vmem:[%s20] sm:%s3]
    %s22 = scalar_lea.vmem [#allocation0], 40
    %23 = vst [vmem:[%s22] sm:%s3] %v21
    %s24 = smul.addr 2, 4
    %s25 = scalar_lea.vmem %s0, %s24
    %v26 = vld [vmem:[%s25] sm:%s3]
    %s27 = scalar_lea.vmem [#allocation0], 32
    %28 = vst [vmem:[%s27] sm:%s3] %v26
    %s29 = smul.addr 2, 3
    %s30 = scalar_lea.vmem %s0, %s29
    %v31 = vld [vmem:[%s30] sm:%s3]
    %s32 = scalar_lea.vmem [#allocation0], 24
    %33 = vst [vmem:[%s32] sm:%s3] %v31
    %s34 = smul.addr 2, 2
    %s35 = scalar_lea.vmem %s0, %s34
    %v36 = vld [vmem:[%s35] sm:%s3]
    %s37 = scalar_lea.vmem [#allocation0], 16
    %38 = vst [vmem:[%s37] sm:%s3] %v36
    %s39 = scalar_lea.vmem %s0, 2
    %v40 = vld [vmem:[%s39] sm:%s3]
    %s41 = scalar_lea.vmem [#allocation0], 8
    %42 = vst [vmem:[%s41] sm:%s3] %v40
    %v43 = vld [vmem:[%s0] sm:%s3]
    %44 = vst [vmem:[#allocation0] sm:%s3] %v43
    %v45 = vld [vmem:[#allocation0] ss:$8 sm:$0xf]
    %v46 = vld [vmem:[#allocation0] ss:$8 sm:$0xf0]
    %vm47 = vcmask 1047556
    %v48 = vsel %vm47, %v46, %v45
    %vm49 = vcmask 523264
    %50 = vst.msk [vmem:[%s1] sm:$0xff] %vm49, %v48
    %s51 = scalar_lea.vmem [#allocation0], 64
    %v52 = vld [vmem:[%s51] sm:$0x1]
    %vm53 = vcmask 523264
    %s54 = scalar_lea.vmem %s1, 8
    %55 = vst.msk [vmem:[%s54] sm:$0x1] %vm53, %v52
    %s56 = scalar_lea.vmem [#allocation0], 1
    %v57 = vld [vmem:[%s56] ss:$8 sm:$0xf]
    %s58 = scalar_lea.vmem [#allocation0], 1
    %v59 = vld [vmem:[%s58] ss:$8 sm:$0xf0]
    %vm60 = vcmask 1047556
    %v61 = vsel %vm60, %v59, %v57
    %62 = vrot.lane.b32.xlu0 %v61, 64
    %v63 = vpop.permute.xlu0 %62
    %vm64 = vcmask 1048064
    %65 = vst.msk [vmem:[%s1] sm:$0xff] %vm64, %v63
    %s66 = scalar_lea.vmem [#allocation0], 65
    %v67 = vld [vmem:[%s66] sm:$0x1]
    %68 = vrot.lane.b32.xlu0 %v67, 64
    %v69 = vpop.permute.xlu0 %68
    %vm70 = vcmask 1048064
    %s71 = scalar_lea.vmem %s1, 8
    %72 = vst.msk [vmem:[%s71] sm:$0x1] %vm70, %v69

// kernel: apply.1
$region0: #{apply.1}
  #allocation0 [shape = 'u32[]', space=smem, size = 0x4, offset = 0x4, fixed_abs, tag = 'smem constant byte address 0x4 - core index']
  #allocation1 [shape = 'u32[144,128]{1,0:T(1,128)}', space=vmem, size = 0x12000, scoped, tag = 'internal scratch']
  %s0 = inlined_call_operand.vmem [shape: f32[1,8,128], index: 0, kind: input, shape index: {}]
  %s1 = inlined_call_operand.vmem [shape: f32[9,128], index: 1, kind: input, shape index: {}]
  %s2 = inlined_call_operand.vmem [shape: f32[9,8,8], index: 2, kind: input, shape index: {}]
  %s3 = inlined_call_operand.vmem [shape: f32[8,1], index: 3, kind: input, shape index: {}]
  %s4 = inlined_call_operand.vmem [shape: f32[9,8,8], index: 4, kind: input, shape index: {}]
  %s5 = inlined_call_operand.vmem [shape: f32[8,1], index: 5, kind: input, shape index: {}]
  %s6 = inlined_call_operand.vmem [shape: f32[1,8,128], index: 6, kind: output, shape index: {}]
  %s7 = sld [smem:[#allocation0]]
  $region34: #{apply.1} parent=0
    _
  %s9 = ssub.s32 1, %s7
  %s10 = scalar_select 0, %s9, %s7
  // Predicated region
  $region2: #{apply.1} parent=0 // pred_check
    _
  $region3: #{apply.1} parent=0 // pred_check_branch
    %12 = sbr.rel (0) target = $region5
  $region4: #{apply.1} parent=0 // pred_region
    _
  $region5: #{apply.1} parent=0 // pred_fallthru
    _
  // Predicated region
  $region6: #{apply.1} parent=0 // pred_check
    _
  $region7: #{apply.1} parent=0 // pred_check_branch
    %14 = sbr.rel (0) target = $region9
  $region8: #{apply.1} parent=0 // pred_region
    _
  $region9: #{apply.1} parent=0 // pred_fallthru
    _
  // Predicated region
  $region10: #{apply.1} parent=0 // pred_check
    _
  $region11: #{apply.1} parent=0 // pred_check_branch
    %16 = sbr.rel (0) target = $region13
  $region12: #{apply.1} parent=0 // pred_region
    _
  $region13: #{apply.1} parent=0 // pred_fallthru
    _
  // Predicated region
  $region14: #{apply.1} parent=0 // pred_check
    _
  $region15: #{apply.1} parent=0 // pred_check_branch
    %18 = sbr.rel (0) target = $region17
  $region16: #{apply.1} parent=0 // pred_region
    _
  $region17: #{apply.1} parent=0 // pred_fallthru
    _
  // Predicated region
  $region18: #{apply.1} parent=0 // pred_check
    _
  $region19: #{apply.1} parent=0 // pred_check_branch
    %20 = sbr.rel (0) target = $region21
  $region20: #{apply.1} parent=0 // pred_region
    _
  $region21: #{apply.1} parent=0 // pred_fallthru
    _
  // Predicated region
  $region22: #{apply.1} parent=0 // pred_check
    _
  $region23: #{apply.1} parent=0 // pred_check_branch
    %22 = sbr.rel (0) target = $region25
  $region24: #{apply.1} parent=0 // pred_region
    _
  $region25: #{apply.1} parent=0 // pred_fallthru
    _
  %v23 = vld [vmem:[%s1] sm:$0xff]
  %v24 = vld [vmem:[%s1 + $0x8] sm:$0x1]
  %v25 = vld [vmem:[%s0] sm:$0xff]
  %26 = vrot.lane.b32.xlu0 %v25, 9
  %v27 = vpop.permute.xlu0 %26
  %v28 = vlaneseq
  %v29 = vshrl.u32 %v28, 7
  %v30 = vsub.s32 0, %v29
  %v31 = vrot.slane %v23, %v30
  %v32 = vmul.f32 %v27, %v31
  %v33 = vld [vmem:[%s2] sm:$0xff]
  %34 = vrot.lane.b32.xlu0 %v25, 8
  %v35 = vpop.permute.xlu0 %34
  %v36 = vlaneseq
  %v37 = vshrl.u32 %v36, 7
  %v38 = vsub.s32 1, %v37
  %v39 = vrot.slane %v23, %v38
  %v40 = vmul.f32 %v35, %v39
  %s41 = scalar_lea.vmem %s2, 8
  %v42 = vld [vmem:[%s41] sm:$0xff]
  %vm43 = vcmask 64512
  %v45 = vsel %vm43, %v42, 0
  %47 = vmatprep.subr.mxu0 0.0
  %48 = vmatpush1.msra.mxu0 %v40
  %49 = vmatprep.subr.mxu0 0.0
  %50 = vmatpush1.msra.mxu0 0.0
  %51 = vmatprep.subr.mxu0 0.0
  %52 = vmatpush1.msra.mxu0 0.0
  %53 = vmatprep.subr.mxu0 0.0
  %54 = vmatpush1.msra.mxu0 0.0
  %55 = vmatprep.subr.mxu0 0.0
  %56 = vmatpush1.msra.mxu0 0.0
  %57 = vmatprep.subr.mxu0 0.0
  %58 = vmatpush1.msra.mxu0 0.0
  %59 = vmatprep.subr.mxu0 0.0
  %60 = vmatpush1.msra.mxu0 0.0
  %61 = vmatprep.subr.mxu0 0.0
  %62 = vmatpush1.msra.mxu0 0.0
  %63 = vmatprep.subr.mxu0 0.0
  %64 = vmatpush1.msra.mxu0 0.0
  %65 = vmatprep.subr.mxu0 0.0
  %66 = vmatpush1.msra.mxu0 0.0
  %67 = vmatprep.subr.mxu0 0.0
  %68 = vmatpush1.msra.mxu0 0.0
  %69 = vmatprep.subr.mxu0 0.0
  %70 = vmatpush1.msra.mxu0 0.0
  %71 = vmatprep.subr.mxu0 0.0
  %72 = vmatpush1.msra.mxu0 0.0
  %73 = vmatprep.subr.mxu0 0.0
  %74 = vmatpush1.msra.mxu0 0.0
  %75 = vmatprep.subr.mxu0 0.0
  %76 = vmatpush1.msra.mxu0 0.0
  %77 = vmatprep.subr.mxu0 0.0
  %78 = vmatpush1.msra.mxu0 0.0
  %79 = vmatprep.subr.mxu0 0.0
  %80 = vmatpush1.msra.mxu0 0.0
  %81 = vmatprep.subr.mxu0 0.0
  %82 = vmatpush1.msra.mxu0 0.0
  %83 = vmatprep.subr.mxu0 0.0
  %84 = vmatpush1.msra.mxu0 0.0
  %85 = vmatprep.subr.mxu0 0.0
  %86 = vmatpush1.msra.mxu0 0.0
  %87 = vmatprep.subr.mxu0 0.0
  %88 = vmatpush1.msra.mxu0 0.0
  %89 = vmatprep.subr.mxu0 0.0
  %90 = vmatpush1.msra.mxu0 0.0
  %91 = vmatprep.subr.mxu0 0.0
  %92 = vmatpush1.msra.mxu0 0.0
  %93 = vmatprep.subr.mxu0 0.0
  %94 = vmatpush1.msra.mxu0 0.0
  %95 = vmatprep.subr.mxu0 0.0
  %96 = vmatpush1.msra.mxu0 0.0
  %97 = vmatprep.subr.mxu0 0.0
  %98 = vmatpush1.msra.mxu0 0.0
  %99 = vmatprep.subr.mxu0 0.0
  %100 = vmatpush1.msra.mxu0 0.0
  %101 = vmatprep.subr.mxu0 0.0
  %102 = vmatpush1.msra.mxu0 0.0
  %103 = vmatprep.subr.mxu0 0.0
  %104 = vmatpush1.msra.mxu0 0.0
  %105 = vmatprep.subr.mxu0 0.0
  %106 = vmatpush1.msra.mxu0 0.0
  %107 = vmatprep.subr.mxu0 0.0
  %108 = vmatpush1.msra.mxu0 0.0
  %109 = vmatprep.subr.mxu0 0.0
  %110 = vmatpush1.msra.mxu0 0.0
  %111 = vmatprep.mubr.f32.mxu0 0.0
  %112 = vmatmul.mubr.f32.gmra.mrb[0].mxu0 %v45
  %v113 = vpop.f32.mrb[0].mxu0
  %v114 = vadd.f32 0.0, %v113
  %v115 = vpop.f32.mrb[0].mxu0
  %116 = vdwg.mxu0
  %v118 = vsel %vm43, %v33, 0
  %120 = vmatprep.subr.mxu0 0.0
  %121 = vmatpush1.msra.mxu0 %v32
  %122 = vmatprep.subr.mxu0 0.0
  %123 = vmatpush1.msra.mxu0 0.0
  %124 = vmatprep.subr.mxu0 0.0
  %125 = vmatpush1.msra.mxu0 0.0
  %126 = vmatprep.subr.mxu0 0.0
  %127 = vmatpush1.msra.mxu0 0.0
  %128 = vmatprep.subr.mxu0 0.0
  %129 = vmatpush1.msra.mxu0 0.0
  %130 = vmatprep.subr.mxu0 0.0
  %131 = vmatpush1.msra.mxu0 0.0
  %132 = vmatprep.subr.mxu0 0.0
  %133 = vmatpush1.msra.mxu0 0.0
  %134 = vmatprep.subr.mxu0 0.0
  %135 = vmatpush1.msra.mxu0 0.0
  %136 = vmatprep.subr.mxu0 0.0
  %137 = vmatpush1.msra.mxu0 0.0
  %138 = vmatprep.subr.mxu0 0.0
  %139 = vmatpush1.msra.mxu0 0.0
  %140 = vmatprep.subr.mxu0 0.0
  %141 = vmatpush1.msra.mxu0 0.0
  %142 = vmatprep.subr.mxu0 0.0
  %143 = vmatpush1.msra.mxu0 0.0
  %144 = vmatprep.subr.mxu0 0.0
  %145 = vmatpush1.msra.mxu0 0.0
  %146 = vmatprep.subr.mxu0 0.0
  %147 = vmatpush1.msra.mxu0 0.0
  %148 = vmatprep.subr.mxu0 0.0
  %149 = vmatpush1.msra.mxu0 0.0
  %150 = vmatprep.subr.mxu0 0.0
  %151 = vmatpush1.msra.mxu0 0.0
  %152 = vmatprep.subr.mxu0 0.0
  %153 = vmatpush1.msra.mxu0 0.0
  %154 = vmatprep.subr.mxu0 0.0
  %155 = vmatpush1.msra.mxu0 0.0
  %156 = vmatprep.subr.mxu0 0.0
  %157 = vmatpush1.msra.mxu0 0.0
  %158 = vmatprep.subr.mxu0 0.0
  %159 = vmatpush1.msra.mxu0 0.0
  %160 = vmatprep.subr.mxu0 0.0
  %161 = vmatpush1.msra.mxu0 0.0
  %162 = vmatprep.subr.mxu0 0.0
  %163 = vmatpush1.msra.mxu0 0.0
  %164 = vmatprep.subr.mxu0 0.0
  %165 = vmatpush1.msra.mxu0 0.0
  %166 = vmatprep.subr.mxu0 0.0
  %167 = vmatpush1.msra.mxu0 0.0
  %168 = vmatprep.subr.mxu0 0.0
  %169 = vmatpush1.msra.mxu0 0.0
  %170 = vmatprep.subr.mxu0 0.0
  %171 = vmatpush1.msra.mxu0 0.0
  %172 = vmatprep.subr.mxu0 0.0
  %173 = vmatpush1.msra.mxu0 0.0
  %174 = vmatprep.subr.mxu0 0.0
  %175 = vmatpush1.msra.mxu0 0.0
  %176 = vmatprep.subr.mxu0 0.0
  %177 = vmatpush1.msra.mxu0 0.0
  %178 = vmatprep.subr.mxu0 0.0
  %179 = vmatpush1.msra.mxu0 0.0
  %180 = vmatprep.subr.mxu0 0.0
  %181 = vmatpush1.msra.mxu0 0.0
  %182 = vmatprep.subr.mxu0 0.0
  %183 = vmatpush1.msra.mxu0 0.0
  %184 = vmatprep.mubr.f32.mxu0 0.0
  %185 = vmatmul.mubr.f32.gmra.mrb[0].mxu0 %v118
  %v186 = vpop.f32.mrb[0].mxu0
  %v187 = vadd.f32 %v114, %v186
  %v188 = vpop.f32.mrb[0].mxu0
  %189 = vdwg.mxu0
  %190 = vrot.lane.b32.xlu0 %v25, 7
  %v191 = vpop.permute.xlu0 %190
  %v192 = vlaneseq
  %v193 = vshrl.u32 %v192, 7
  %v194 = vsub.s32 2, %v193
  %v195 = vrot.slane %v23, %v194
  %v196 = vmul.f32 %v191, %v195
  %s197 = scalar_lea.vmem %s2, 16
  %v198 = vld [vmem:[%s197] sm:$0xff]
  %v200 = vsel %vm43, %v198, 0
  %202 = vmatprep.subr.mxu0 0.0
  %203 = vmatpush1.msra.mxu0 %v196
  %204 = vmatprep.subr.mxu0 0.0
  %205 = vmatpush1.msra.mxu0 0.0
  %206 = vmatprep.subr.mxu0 0.0
  %207 = vmatpush1.msra.mxu0 0.0
  %208 = vmatprep.subr.mxu0 0.0
  %209 = vmatpush1.msra.mxu0 0.0
  %210 = vmatprep.subr.mxu0 0.0
  %211 = vmatpush1.msra.mxu0 0.0
  %212 = vmatprep.subr.mxu0 0.0
  %213 = vmatpush1.msra.mxu0 0.0
  %214 = vmatprep.subr.mxu0 0.0
  %215 = vmatpush1.msra.mxu0 0.0
  %216 = vmatprep.subr.mxu0 0.0
  %217 = vmatpush1.msra.mxu0 0.0
  %218 = vmatprep.subr.mxu0 0.0
  %219 = vmatpush1.msra.mxu0 0.0
  %220 = vmatprep.subr.mxu0 0.0
  %221 = vmatpush1.msra.mxu0 0.0
  %222 = vmatprep.subr.mxu0 0.0
  %223 = vmatpush1.msra.mxu0 0.0
  %224 = vmatprep.subr.mxu0 0.0
  %225 = vmatpush1.msra.mxu0 0.0
  %226 = vmatprep.subr.mxu0 0.0
  %227 = vmatpush1.msra.mxu0 0.0
  %228 = vmatprep.subr.mxu0 0.0
  %229 = vmatpush1.msra.mxu0 0.0
  %230 = vmatprep.subr.mxu0 0.0
  %231 = vmatpush1.msra.mxu0 0.0
  %232 = vmatprep.subr.mxu0 0.0
  %233 = vmatpush1.msra.mxu0 0.0
  %234 = vmatprep.subr.mxu0 0.0
  %235 = vmatpush1.msra.mxu0 0.0
  %236 = vmatprep.subr.mxu0 0.0
  %237 = vmatpush1.msra.mxu0 0.0
  %238 = vmatprep.subr.mxu0 0.0
  %239 = vmatpush1.msra.mxu0 0.0
  %240 = vmatprep.subr.mxu0 0.0
  %241 = vmatpush1.msra.mxu0 0.0
  %242 = vmatprep.subr.mxu0 0.0
  %243 = vmatpush1.msra.mxu0 0.0
  %244 = vmatprep.subr.mxu0 0.0
  %245 = vmatpush1.msra.mxu0 0.0
  %246 = vmatprep.subr.mxu0 0.0
  %247 = vmatpush1.msra.mxu0 0.0
  %248 = vmatprep.subr.mxu0 0.0
  %249 = vmatpush1.msra.mxu0 0.0
  %250 = vmatprep.subr.mxu0 0.0
  %251 = vmatpush1.msra.mxu0 0.0
  %252 = vmatprep.subr.mxu0 0.0
  %253 = vmatpush1.msra.mxu0 0.0
  %254 = vmatprep.subr.mxu0 0.0
  %255 = vmatpush1.msra.mxu0 0.0
  %256 = vmatprep.subr.mxu0 0.0
  %257 = vmatpush1.msra.mxu0 0.0
  %258 = vmatprep.subr.mxu0 0.0
  %259 = vmatpush1.msra.mxu0 0.0
  %260 = vmatprep.subr.mxu0 0.0
  %261 = vmatpush1.msra.mxu0 0.0
  %262 = vmatprep.subr.mxu0 0.0
  %263 = vmatpush1.msra.mxu0 0.0
  %264 = vmatprep.subr.mxu0 0.0
  %265 = vmatpush1.msra.mxu0 0.0
  %266 = vmatprep.mubr.f32.mxu0 0.0
  %267 = vmatmul.mubr.f32.gmra.mrb[0].mxu0 %v200
  %v268 = vpop.f32.mrb[0].mxu0
  %v269 = vadd.f32 0.0, %v268
  %v270 = vpop.f32.mrb[0].mxu0
  %271 = vdwg.mxu0
  %v272 = vadd.f32 %v187, %v269
  %273 = vrot.lane.b32.xlu0 %v25, 1
  %v274 = vpop.permute.xlu0 %273
  %v275 = vlaneseq
  %v276 = vshrl.u32 %v275, 7
  %v277 = vsub.s32 3, %v276
  %v278 = vrot.slane %v23, %v277
  %v279 = vmul.f32 %v274, %v278
  %s280 = scalar_lea.vmem %s2, 24
  %v281 = vld [vmem:[%s280] sm:$0xff]
  %v283 = vsel %vm43, %v281, 0
  %285 = vmatprep.subr.mxu0 0.0
  %286 = vmatpush1.msra.mxu0 %v279
  %287 = vmatprep.subr.mxu0 0.0
  %288 = vmatpush1.msra.mxu0 0.0
  %289 = vmatprep.subr.mxu0 0.0
  %290 = vmatpush1.msra.mxu0 0.0
  %291 = vmatprep.subr.mxu0 0.0
  %292 = vmatpush1.msra.mxu0 0.0
  %293 = vmatprep.subr.mxu0 0.0
  %294 = vmatpush1.msra.mxu0 0.0
  %295 = vmatprep.subr.mxu0 0.0
  %296 = vmatpush1.msra.mxu0 0.0
  %297 = vmatprep.subr.mxu0 0.0
  %298 = vmatpush1.msra.mxu0 0.0
  %299 = vmatprep.subr.mxu0 0.0
  %300 = vmatpush1.msra.mxu0 0.0
  %301 = vmatprep.subr.mxu0 0.0
  %302 = vmatpush1.msra.mxu0 0.0
  %303 = vmatprep.subr.mxu0 0.0
  %304 = vmatpush1.msra.mxu0 0.0
  %305 = vmatprep.subr.mxu0 0.0
  %306 = vmatpush1.msra.mxu0 0.0
  %307 = vmatprep.subr.mxu0 0.0
  %308 = vmatpush1.msra.mxu0 0.0
  %309 = vmatprep.subr.mxu0 0.0
  %310 = vmatpush1.msra.mxu0 0.0
  %311 = vmatprep.subr.mxu0 0.0
  %312 = vmatpush1.msra.mxu0 0.0
  %313 = vmatprep.subr.mxu0 0.0
  %314 = vmatpush1.msra.mxu0 0.0
  %315 = vmatprep.subr.mxu0 0.0
  %316 = vmatpush1.msra.mxu0 0.0
  %317 = vmatprep.subr.mxu0 0.0
  %318 = vmatpush1.msra.mxu0 0.0
  %319 = vmatprep.subr.mxu0 0.0
  %320 = vmatpush1.msra.mxu0 0.0
  %321 = vmatprep.subr.mxu0 0.0
  %322 = vmatpush1.msra.mxu0 0.0
  %323 = vmatprep.subr.mxu0 0.0
  %324 = vmatpush1.msra.mxu0 0.0
  %325 = vmatprep.subr.mxu0 0.0
  %326 = vmatpush1.msra.mxu0 0.0
  %327 = vmatprep.subr.mxu0 0.0
  %328 = vmatpush1.msra.mxu0 0.0
  %329 = vmatprep.subr.mxu0 0.0
  %330 = vmatpush1.msra.mxu0 0.0
  %331 = vmatprep.subr.mxu0 0.0
  %332 = vmatpush1.msra.mxu0 0.0
  %333 = vmatprep.subr.mxu0 0.0
  %334 = vmatpush1.msra.mxu0 0.0
  %335 = vmatprep.subr.mxu0 0.0
  %336 = vmatpush1.msra.mxu0 0.0
  %337 = vmatprep.subr.mxu0 0.0
  %338 = vmatpush1.msra.mxu0 0.0
  %339 = vmatprep.subr.mxu0 0.0
  %340 = vmatpush1.msra.mxu0 0.0
  %341 = vmatprep.subr.mxu0 0.0
  %342 = vmatpush1.msra.mxu0 0.0
  %343 = vmatprep.subr.mxu0 0.0
  %344 = vmatpush1.msra.mxu0 0.0
  %345 = vmatprep.subr.mxu0 0.0
  %346 = vmatpush1.msra.mxu0 0.0
  %347 = vmatprep.subr.mxu0 0.0
  %348 = vmatpush1.msra.mxu0 0.0
  %349 = vmatprep.mubr.f32.mxu0 0.0
  %350 = vmatmul.mubr.f32.gmra.mrb[0].mxu0 %v283
  %v351 = vpop.f32.mrb[0].mxu0
  %v352 = vadd.f32 0.0, %v351
  %v353 = vpop.f32.mrb[0].mxu0
  %354 = vdwg.mxu0
  %v355 = vadd.f32 %v272, %v352
  %s356 = scalar_lea.vmem %s2, 32
  %v357 = vld [vmem:[%s356] sm:$0xff]
  %v359 = vsel %vm43, %v357, 0
  %361 = vmatprep.subr.mxu0 0.0
  %362 = vmatpush1.msra.mxu0 %v25
  %363 = vmatprep.subr.mxu0 0.0
  %364 = vmatpush1.msra.mxu0 0.0
  %365 = vmatprep.subr.mxu0 0.0
  %366 = vmatpush1.msra.mxu0 0.0
  %367 = vmatprep.subr.mxu0 0.0
  %368 = vmatpush1.msra.mxu0 0.0
  %369 = vmatprep.subr.mxu0 0.0
  %370 = vmatpush1.msra.mxu0 0.0
  %371 = vmatprep.subr.mxu0 0.0
  %372 = vmatpush1.msra.mxu0 0.0
  %373 = vmatprep.subr.mxu0 0.0
  %374 = vmatpush1.msra.mxu0 0.0
  %375 = vmatprep.subr.mxu0 0.0
  %376 = vmatpush1.msra.mxu0 0.0
  %377 = vmatprep.subr.mxu0 0.0
  %378 = vmatpush1.msra.mxu0 0.0
  %379 = vmatprep.subr.mxu0 0.0
  %380 = vmatpush1.msra.mxu0 0.0
  %381 = vmatprep.subr.mxu0 0.0
  %382 = vmatpush1.msra.mxu0 0.0
  %383 = vmatprep.subr.mxu0 0.0
  %384 = vmatpush1.msra.mxu0 0.0
  %385 = vmatprep.subr.mxu0 0.0
  %386 = vmatpush1.msra.mxu0 0.0
  %387 = vmatprep.subr.mxu0 0.0
  %388 = vmatpush1.msra.mxu0 0.0
  %389 = vmatprep.subr.mxu0 0.0
  %390 = vmatpush1.msra.mxu0 0.0
  %391 = vmatprep.subr.mxu0 0.0
  %392 = vmatpush1.msra.mxu0 0.0
  %393 = vmatprep.subr.mxu0 0.0
  %394 = vmatpush1.msra.mxu0 0.0
  %395 = vmatprep.subr.mxu0 0.0
  %396 = vmatpush1.msra.mxu0 0.0
  %397 = vmatprep.subr.mxu0 0.0
  %398 = vmatpush1.msra.mxu0 0.0
  %399 = vmatprep.subr.mxu0 0.0
  %400 = vmatpush1.msra.mxu0 0.0
  %401 = vmatprep.subr.mxu0 0.0
  %402 = vmatpush1.msra.mxu0 0.0
  %403 = vmatprep.subr.mxu0 0.0
  %404 = vmatpush1.msra.mxu0 0.0
  %405 = vmatprep.subr.mxu0 0.0
  %406 = vmatpush1.msra.mxu0 0.0
  %407 = vmatprep.subr.mxu0 0.0
  %408 = vmatpush1.msra.mxu0 0.0
  %409 = vmatprep.subr.mxu0 0.0
  %410 = vmatpush1.msra.mxu0 0.0
  %411 = vmatprep.subr.mxu0 0.0
  %412 = vmatpush1.msra.mxu0 0.0
  %413 = vmatprep.subr.mxu0 0.0
  %414 = vmatpush1.msra.mxu0 0.0
  %415 = vmatprep.subr.mxu0 0.0
  %416 = vmatpush1.msra.mxu0 0.0
  %417 = vmatprep.subr.mxu0 0.0
  %418 = vmatpush1.msra.mxu0 0.0
  %419 = vmatprep.subr.mxu0 0.0
  %420 = vmatpush1.msra.mxu0 0.0
  %421 = vmatprep.subr.mxu0 0.0
  %422 = vmatpush1.msra.mxu0 0.0
  %423 = vmatprep.subr.mxu0 0.0
  %424 = vmatpush1.msra.mxu0 0.0
  %425 = vmatprep.mubr.f32.mxu0 0.0
  %426 = vmatmul.mubr.f32.gmra.mrb[0].mxu0 %v359
  %v427 = vpop.f32.mrb[0].mxu0
  %v428 = vadd.f32 0.0, %v427
  %v429 = vpop.f32.mrb[0].mxu0
  %430 = vdwg.mxu0
  %v431 = vadd.f32 %v355, %v428
  %432 = vrot.lane.b32.xlu0 %v25, 127
  %v433 = vpop.permute.xlu0 %432
  %v434 = vlaneseq
  %v435 = vshrl.u32 %v434, 7
  %v436 = vsub.s32 5, %v435
  %v437 = vrot.slane %v23, %v436
  %v438 = vmul.f32 %v433, %v437
  %s439 = scalar_lea.vmem %s2, 40
  %v440 = vld [vmem:[%s439] sm:$0xff]
  %v442 = vsel %vm43, %v440, 0
  %444 = vmatprep.subr.mxu0 0.0
  %445 = vmatpush1.msra.mxu0 %v438
  %446 = vmatprep.subr.mxu0 0.0
  %447 = vmatpush1.msra.mxu0 0.0
  %448 = vmatprep.subr.mxu0 0.0
  %449 = vmatpush1.msra.mxu0 0.0
  %450 = vmatprep.subr.mxu0 0.0
  %451 = vmatpush1.msra.mxu0 0.0
  %452 = vmatprep.subr.mxu0 0.0
  %453 = vmatpush1.msra.mxu0 0.0
  %454 = vmatprep.subr.mxu0 0.0
  %455 = vmatpush1.msra.mxu0 0.0
  %456 = vmatprep.subr.mxu0 0.0
  %457 = vmatpush1.msra.mxu0 0.0
  %458 = vmatprep.subr.mxu0 0.0
  %459 = vmatpush1.msra.mxu0 0.0
  %460 = vmatprep.subr.mxu0 0.0
  %461 = vmatpush1.msra.mxu0 0.0
  %462 = vmatprep.subr.mxu0 0.0
  %463 = vmatpush1.msra.mxu0 0.0
  %464 = vmatprep.subr.mxu0 0.0
  %465 = vmatpush1.msra.mxu0 0.0
  %466 = vmatprep.subr.mxu0 0.0
  %467 = vmatpush1.msra.mxu0 0.0
  %468 = vmatprep.subr.mxu0 0.0
  %469 = vmatpush1.msra.mxu0 0.0
  %470 = vmatprep.subr.mxu0 0.0
  %471 = vmatpush1.msra.mxu0 0.0
  %472 = vmatprep.subr.mxu0 0.0
  %473 = vmatpush1.msra.mxu0 0.0
  %474 = vmatprep.subr.mxu0 0.0
  %475 = vmatpush1.msra.mxu0 0.0
  %476 = vmatprep.subr.mxu0 0.0
  %477 = vmatpush1.msra.mxu0 0.0
  %478 = vmatprep.subr.mxu0 0.0
  %479 = vmatpush1.msra.mxu0 0.0
  %480 = vmatprep.subr.mxu0 0.0
  %481 = vmatpush1.msra.mxu0 0.0
  %482 = vmatprep.subr.mxu0 0.0
  %483 = vmatpush1.msra.mxu0 0.0
  %484 = vmatprep.subr.mxu0 0.0
  %485 = vmatpush1.msra.mxu0 0.0
  %486 = vmatprep.subr.mxu0 0.0
  %487 = vmatpush1.msra.mxu0 0.0
  %488 = vmatprep.subr.mxu0 0.0
  %489 = vmatpush1.msra.mxu0 0.0
  %490 = vmatprep.subr.mxu0 0.0
  %491 = vmatpush1.msra.mxu0 0.0
  %492 = vmatprep.subr.mxu0 0.0
  %493 = vmatpush1.msra.mxu0 0.0
  %494 = vmatprep.subr.mxu0 0.0
  %495 = vmatpush1.msra.mxu0 0.0
  %496 = vmatprep.subr.mxu0 0.0
  %497 = vmatpush1.msra.mxu0 0.0
  %498 = vmatprep.subr.mxu0 0.0
  %499 = vmatpush1.msra.mxu0 0.0
  %500 = vmatprep.subr.mxu0 0.0
  %501 = vmatpush1.msra.mxu0 0.0
  %502 = vmatprep.subr.mxu0 0.0
  %503 = vmatpush1.msra.mxu0 0.0
  %504 = vmatprep.subr.mxu0 0.0
  %505 = vmatpush1.msra.mxu0 0.0
  %506 = vmatprep.subr.mxu0 0.0
  %507 = vmatpush1.msra.mxu0 0.0
  %508 = vmatprep.mubr.f32.mxu0 0.0
  %509 = vmatmul.mubr.f32.gmra.mrb[0].mxu0 %v442
  %v510 = vpop.f32.mrb[0].mxu0
  %v511 = vadd.f32 0.0, %v510
  %v512 = vpop.f32.mrb[0].mxu0
  %513 = vdwg.mxu0
  %v514 = vadd.f32 %v431, %v511
  %515 = vrot.lane.b32.xlu0 %v25, 121
  %v516 = vpop.permute.xlu0 %515
  %v517 = vlaneseq
  %v518 = vshrl.u32 %v517, 7
  %v519 = vsub.s32 6, %v518
  %v520 = vrot.slane %v23, %v519
  %v521 = vmul.f32 %v516, %v520
  %s522 = scalar_lea.vmem %s2, 48
  %v523 = vld [vmem:[%s522] sm:$0xff]
  %v525 = vsel %vm43, %v523, 0
  %527 = vmatprep.subr.mxu0 0.0
  %528 = vmatpush1.msra.mxu0 %v521
  %529 = vmatprep.subr.mxu0 0.0
  %530 = vmatpush1.msra.mxu0 0.0
  %531 = vmatprep.subr.mxu0 0.0
  %532 = vmatpush1.msra.mxu0 0.0
  %533 = vmatprep.subr.mxu0 0.0
  %534 = vmatpush1.msra.mxu0 0.0
  %535 = vmatprep.subr.mxu0 0.0
  %536 = vmatpush1.msra.mxu0 0.0
  %537 = vmatprep.subr.mxu0 0.0
  %538 = vmatpush1.msra.mxu0 0.0
  %539 = vmatprep.subr.mxu0 0.0
  %540 = vmatpush1.msra.mxu0 0.0
  %541 = vmatprep.subr.mxu0 0.0
  %542 = vmatpush1.msra.mxu0 0.0
  %543 = vmatprep.subr.mxu0 0.0
  %544 = vmatpush1.msra.mxu0 0.0
  %545 = vmatprep.subr.mxu0 0.0
  %546 = vmatpush1.msra.mxu0 0.0
  %547 = vmatprep.subr.mxu0 0.0
  %548 = vmatpush1.msra.mxu0 0.0
  %549 = vmatprep.subr.mxu0 0.0
  %550 = vmatpush1.msra.mxu0 0.0
  %551 = vmatprep.subr.mxu0 0.0
  %552 = vmatpush1.msra.mxu0 0.0
  %553 = vmatprep.subr.mxu0 0.0
  %554 = vmatpush1.msra.mxu0 0.0
  %555 = vmatprep.subr.mxu0 0.0
  %556 = vmatpush1.msra.mxu0 0.0
  %557 = vmatprep.subr.mxu0 0.0
  %558 = vmatpush1.msra.mxu0 0.0
  %559 = vmatprep.subr.mxu0 0.0
  %560 = vmatpush1.msra.mxu0 0.0
  %561 = vmatprep.subr.mxu0 0.0
  %562 = vmatpush1.msra.mxu0 0.0
  %563 = vmatprep.subr.mxu0 0.0
  %564 = vmatpush1.msra.mxu0 0.0
  %565 = vmatprep.subr.mxu0 0.0
  %566 = vmatpush1.msra.mxu0 0.0
  %567 = vmatprep.subr.mxu0 0.0
  %568 = vmatpush1.msra.mxu0 0.0
  %569 = vmatprep.subr.mxu0 0.0
  %570 = vmatpush1.msra.mxu0 0.0
  %571 = vmatprep.subr.mxu0 0.0
  %572 = vmatpush1.msra.mxu0 0.0
  %573 = vmatprep.subr.mxu0 0.0
  %574 = vmatpush1.msra.mxu0 0.0
  %575 = vmatprep.subr.mxu0 0.0
  %576 = vmatpush1.msra.mxu0 0.0
  %577 = vmatprep.subr.mxu0 0.0
  %578 = vmatpush1.msra.mxu0 0.0
  %579 = vmatprep.subr.mxu0 0.0
  %580 = vmatpush1.msra.mxu0 0.0
  %581 = vmatprep.subr.mxu0 0.0
  %582 = vmatpush1.msra.mxu0 0.0
  %583 = vmatprep.subr.mxu0 0.0
  %584 = vmatpush1.msra.mxu0 0.0
  %585 = vmatprep.subr.mxu0 0.0
  %586 = vmatpush1.msra.mxu0 0.0
  %587 = vmatprep.subr.mxu0 0.0
  %588 = vmatpush1.msra.mxu0 0.0
  %589 = vmatprep.subr.mxu0 0.0
  %590 = vmatpush1.msra.mxu0 0.0
  %591 = vmatprep.mubr.f32.mxu0 0.0
  %592 = vmatmul.mubr.f32.gmra.mrb[0].mxu0 %v525
  %v593 = vpop.f32.mrb[0].mxu0
  %v594 = vadd.f32 0.0, %v593
  %v595 = vpop.f32.mrb[0].mxu0
  %596 = vdwg.mxu0
  %v597 = vadd.f32 %v514, %v594
  %598 = vrot.lane.b32.xlu0 %v25, 120
  %v599 = vpop.permute.xlu0 %598
  %v600 = vlaneseq
  %v601 = vshrl.u32 %v600, 7
  %v602 = vsub.s32 7, %v601
  %v603 = vrot.slane %v23, %v602
  %v604 = vmul.f32 %v599, %v603
  %s605 = scalar_lea.vmem %s2, 56
  %v606 = vld [vmem:[%s605] sm:$0xff]
  %v608 = vsel %vm43, %v606, 0
  %610 = vmatprep.subr.mxu0 0.0
  %611 = vmatpush1.msra.mxu0 %v604
  %612 = vmatprep.subr.mxu0 0.0
  %613 = vmatpush1.msra.mxu0 0.0
  %614 = vmatprep.subr.mxu0 0.0
  %615 = vmatpush1.msra.mxu0 0.0
  %616 = vmatprep.subr.mxu0 0.0
  %617 = vmatpush1.msra.mxu0 0.0
  %618 = vmatprep.subr.mxu0 0.0
  %619 = vmatpush1.msra.mxu0 0.0
  %620 = vmatprep.subr.mxu0 0.0
  %621 = vmatpush1.msra.mxu0 0.0
  %622 = vmatprep.subr.mxu0 0.0
  %623 = vmatpush1.msra.mxu0 0.0
  %624 = vmatprep.subr.mxu0 0.0
  %625 = vmatpush1.msra.mxu0 0.0
  %626 = vmatprep.subr.mxu0 0.0
  %627 = vmatpush1.msra.mxu0 0.0
  %628 = vmatprep.subr.mxu0 0.0
  %629 = vmatpush1.msra.mxu0 0.0
  %630 = vmatprep.subr.mxu0 0.0
  %631 = vmatpush1.msra.mxu0 0.0
  %632 = vmatprep.subr.mxu0 0.0
  %633 = vmatpush1.msra.mxu0 0.0
  %634 = vmatprep.subr.mxu0 0.0
  %635 = vmatpush1.msra.mxu0 0.0
  %636 = vmatprep.subr.mxu0 0.0
  %637 = vmatpush1.msra.mxu0 0.0
  %638 = vmatprep.subr.mxu0 0.0
  %639 = vmatpush1.msra.mxu0 0.0
  %640 = vmatprep.subr.mxu0 0.0
  %641 = vmatpush1.msra.mxu0 0.0
  %642 = vmatprep.subr.mxu0 0.0
  %643 = vmatpush1.msra.mxu0 0.0
  %644 = vmatprep.subr.mxu0 0.0
  %645 = vmatpush1.msra.mxu0 0.0
  %646 = vmatprep.subr.mxu0 0.0
  %647 = vmatpush1.msra.mxu0 0.0
  %648 = vmatprep.subr.mxu0 0.0
  %649 = vmatpush1.msra.mxu0 0.0
  %650 = vmatprep.subr.mxu0 0.0
  %651 = vmatpush1.msra.mxu0 0.0
  %652 = vmatprep.subr.mxu0 0.0
  %653 = vmatpush1.msra.mxu0 0.0
  %654 = vmatprep.subr.mxu0 0.0
  %655 = vmatpush1.msra.mxu0 0.0
  %656 = vmatprep.subr.mxu0 0.0
  %657 = vmatpush1.msra.mxu0 0.0
  %658 = vmatprep.subr.mxu0 0.0
  %659 = vmatpush1.msra.mxu0 0.0
  %660 = vmatprep.subr.mxu0 0.0
  %661 = vmatpush1.msra.mxu0 0.0
  %662 = vmatprep.subr.mxu0 0.0
  %663 = vmatpush1.msra.mxu0 0.0
  %664 = vmatprep.subr.mxu0 0.0
  %665 = vmatpush1.msra.mxu0 0.0
  %666 = vmatprep.subr.mxu0 0.0
  %667 = vmatpush1.msra.mxu0 0.0
  %668 = vmatprep.subr.mxu0 0.0
  %669 = vmatpush1.msra.mxu0 0.0
  %670 = vmatprep.subr.mxu0 0.0
  %671 = vmatpush1.msra.mxu0 0.0
  %672 = vmatprep.subr.mxu0 0.0
  %673 = vmatpush1.msra.mxu0 0.0
  %674 = vmatprep.mubr.f32.mxu0 0.0
  %675 = vmatmul.mubr.f32.gmra.mrb[0].mxu0 %v608
  %v676 = vpop.f32.mrb[0].mxu0
  %v677 = vadd.f32 0.0, %v676
  %v678 = vpop.f32.mrb[0].mxu0
  %679 = vdwg.mxu0
  %v680 = vadd.f32 %v597, %v677
  %681 = vrot.lane.b32.xlu0 %v25, 119
  %v682 = vpop.permute.xlu0 %681
  %v683 = vlaneseq
  %v684 = vshrl.u32 %v683, 7
  %v685 = vsub.s32 0, %v684
  %v686 = vrot.slane %v24, %v685
  %v687 = vmul.f32 %v682, %v686
  %s688 = scalar_lea.vmem %s2, 64
  %v689 = vld [vmem:[%s688] sm:$0xff]
  %v691 = vsel %vm43, %v689, 0
  %693 = vmatprep.subr.mxu0 0.0
  %694 = vmatpush1.msra.mxu0 %v687
  %695 = vmatprep.subr.mxu0 0.0
  %696 = vmatpush1.msra.mxu0 0.0
  %697 = vmatprep.subr.mxu0 0.0
  %698 = vmatpush1.msra.mxu0 0.0
  %699 = vmatprep.subr.mxu0 0.0
  %700 = vmatpush1.msra.mxu0 0.0
  %701 = vmatprep.subr.mxu0 0.0
  %702 = vmatpush1.msra.mxu0 0.0
  %703 = vmatprep.subr.mxu0 0.0
  %704 = vmatpush1.msra.mxu0 0.0
  %705 = vmatprep.subr.mxu0 0.0
  %706 = vmatpush1.msra.mxu0 0.0
  %707 = vmatprep.subr.mxu0 0.0
  %708 = vmatpush1.msra.mxu0 0.0
  %709 = vmatprep.subr.mxu0 0.0
  %710 = vmatpush1.msra.mxu0 0.0
  %711 = vmatprep.subr.mxu0 0.0
  %712 = vmatpush1.msra.mxu0 0.0
  %713 = vmatprep.subr.mxu0 0.0
  %714 = vmatpush1.msra.mxu0 0.0
  %715 = vmatprep.subr.mxu0 0.0
  %716 = vmatpush1.msra.mxu0 0.0
  %717 = vmatprep.subr.mxu0 0.0
  %718 = vmatpush1.msra.mxu0 0.0
  %719 = vmatprep.subr.mxu0 0.0
  %720 = vmatpush1.msra.mxu0 0.0
  %721 = vmatprep.subr.mxu0 0.0
  %722 = vmatpush1.msra.mxu0 0.0
  %723 = vmatprep.subr.mxu0 0.0
  %724 = vmatpush1.msra.mxu0 0.0
  %725 = vmatprep.subr.mxu0 0.0
  %726 = vmatpush1.msra.mxu0 0.0
  %727 = vmatprep.subr.mxu0 0.0
  %728 = vmatpush1.msra.mxu0 0.0
  %729 = vmatprep.subr.mxu0 0.0
  %730 = vmatpush1.msra.mxu0 0.0
  %731 = vmatprep.subr.mxu0 0.0
  %732 = vmatpush1.msra.mxu0 0.0
  %733 = vmatprep.subr.mxu0 0.0
  %734 = vmatpush1.msra.mxu0 0.0
  %735 = vmatprep.subr.mxu0 0.0
  %736 = vmatpush1.msra.mxu0 0.0
  %737 = vmatprep.subr.mxu0 0.0
  %738 = vmatpush1.msra.mxu0 0.0
  %739 = vmatprep.subr.mxu0 0.0
  %740 = vmatpush1.msra.mxu0 0.0
  %741 = vmatprep.subr.mxu0 0.0
  %742 = vmatpush1.msra.mxu0 0.0
  %743 = vmatprep.subr.mxu0 0.0
  %744 = vmatpush1.msra.mxu0 0.0
  %745 = vmatprep.subr.mxu0 0.0
  %746 = vmatpush1.msra.mxu0 0.0
  %747 = vmatprep.subr.mxu0 0.0
  %748 = vmatpush1.msra.mxu0 0.0
  %749 = vmatprep.subr.mxu0 0.0
  %750 = vmatpush1.msra.mxu0 0.0
  %751 = vmatprep.subr.mxu0 0.0
  %752 = vmatpush1.msra.mxu0 0.0
  %753 = vmatprep.subr.mxu0 0.0
  %754 = vmatpush1.msra.mxu0 0.0
  %755 = vmatprep.subr.mxu0 0.0
  %756 = vmatpush1.msra.mxu0 0.0
  %757 = vmatprep.mubr.f32.mxu0 0.0
  %758 = vmatmul.mubr.f32.gmra.mrb[0].mxu0 %v691
  %v759 = vpop.f32.mrb[0].mxu0
  %v760 = vadd.f32 0.0, %v759
  %v761 = vpop.f32.mrb[0].mxu0
  %762 = vdwg.mxu0
  %v763 = vadd.f32 %v680, %v760
  %v764 = vld [vmem:[%s3] sm:$0xff]
  %766 = vset.pattern.permute.xlu0 0
  %767 = vperm.xlu0 %766, %v764
  %v768 = vpop.permute.xlu0 %767
  %v770 = vadd.f32 %v763, %v768
  %v771 = vmax.f32 %v770, 0.0
  %772 = vrot.lane.b32.xlu0 %v771, 9
  %v773 = vpop.permute.xlu0 %772
  %v774 = vmul.f32 %v773, %v31
  %v775 = vld [vmem:[%s4] sm:$0xff]
  %776 = vrot.lane.b32.xlu0 %v771, 8
  %v777 = vpop.permute.xlu0 %776
  %v778 = vmul.f32 %v777, %v39
  %s779 = scalar_lea.vmem %s4, 8
  %v780 = vld [vmem:[%s779] sm:$0xff]
  %v782 = vsel %vm43, %v780, 0
  %784 = vmatprep.subr.mxu0 0.0
  %785 = vmatpush1.msra.mxu0 %v778
  %786 = vmatprep.subr.mxu0 0.0
  %787 = vmatpush1.msra.mxu0 0.0
  %788 = vmatprep.subr.mxu0 0.0
  %789 = vmatpush1.msra.mxu0 0.0
  %790 = vmatprep.subr.mxu0 0.0
  %791 = vmatpush1.msra.mxu0 0.0
  %792 = vmatprep.subr.mxu0 0.0
  %793 = vmatpush1.msra.mxu0 0.0
  %794 = vmatprep.subr.mxu0 0.0
  %795 = vmatpush1.msra.mxu0 0.0
  %796 = vmatprep.subr.mxu0 0.0
  %797 = vmatpush1.msra.mxu0 0.0
  %798 = vmatprep.subr.mxu0 0.0
  %799 = vmatpush1.msra.mxu0 0.0
  %800 = vmatprep.subr.mxu0 0.0
  %801 = vmatpush1.msra.mxu0 0.0
  %802 = vmatprep.subr.mxu0 0.0
  %803 = vmatpush1.msra.mxu0 0.0
  %804 = vmatprep.subr.mxu0 0.0
  %805 = vmatpush1.msra.mxu0 0.0
  %806 = vmatprep.subr.mxu0 0.0
  %807 = vmatpush1.msra.mxu0 0.0
  %808 = vmatprep.subr.mxu0 0.0
  %809 = vmatpush1.msra.mxu0 0.0
  %810 = vmatprep.subr.mxu0 0.0
  %811 = vmatpush1.msra.mxu0 0.0
  %812 = vmatprep.subr.mxu0 0.0
  %813 = vmatpush1.msra.mxu0 0.0
  %814 = vmatprep.subr.mxu0 0.0
  %815 = vmatpush1.msra.mxu0 0.0
  %816 = vmatprep.subr.mxu0 0.0
  %817 = vmatpush1.msra.mxu0 0.0
  %818 = vmatprep.subr.mxu0 0.0
  %819 = vmatpush1.msra.mxu0 0.0
  %820 = vmatprep.subr.mxu0 0.0
  %821 = vmatpush1.msra.mxu0 0.0
  %822 = vmatprep.subr.mxu0 0.0
  %823 = vmatpush1.msra.mxu0 0.0
  %824 = vmatprep.subr.mxu0 0.0
  %825 = vmatpush1.msra.mxu0 0.0
  %826 = vmatprep.subr.mxu0 0.0
  %827 = vmatpush1.msra.mxu0 0.0
  %828 = vmatprep.subr.mxu0 0.0
  %829 = vmatpush1.msra.mxu0 0.0
  %830 = vmatprep.subr.mxu0 0.0
  %831 = vmatpush1.msra.mxu0 0.0
  %832 = vmatprep.subr.mxu0 0.0
  %833 = vmatpush1.msra.mxu0 0.0
  %834 = vmatprep.subr.mxu0 0.0
  %835 = vmatpush1.msra.mxu0 0.0
  %836 = vmatprep.subr.mxu0 0.0
  %837 = vmatpush1.msra.mxu0 0.0
  %838 = vmatprep.subr.mxu0 0.0
  %839 = vmatpush1.msra.mxu0 0.0
  %840 = vmatprep.subr.mxu0 0.0
  %841 = vmatpush1.msra.mxu0 0.0
  %842 = vmatprep.subr.mxu0 0.0
  %843 = vmatpush1.msra.mxu0 0.0
  %844 = vmatprep.subr.mxu0 0.0
  %845 = vmatpush1.msra.mxu0 0.0
  %846 = vmatprep.subr.mxu0 0.0
  %847 = vmatpush1.msra.mxu0 0.0
  %848 = vmatprep.mubr.f32.mxu0 0.0
  %849 = vmatmul.mubr.f32.gmra.mrb[0].mxu0 %v782
  %v850 = vpop.f32.mrb[0].mxu0
  %v851 = vadd.f32 0.0, %v850
  %v852 = vpop.f32.mrb[0].mxu0
  %853 = vdwg.mxu0
  %v855 = vsel %vm43, %v775, 0
  %857 = vmatprep.subr.mxu0 0.0
  %858 = vmatpush1.msra.mxu0 %v774
  %859 = vmatprep.subr.mxu0 0.0
  %860 = vmatpush1.msra.mxu0 0.0
  %861 = vmatprep.subr.mxu0 0.0
  %862 = vmatpush1.msra.mxu0 0.0
  %863 = vmatprep.subr.mxu0 0.0
  %864 = vmatpush1.msra.mxu0 0.0
  %865 = vmatprep.subr.mxu0 0.0
  %866 = vmatpush1.msra.mxu0 0.0
  %867 = vmatprep.subr.mxu0 0.0
  %868 = vmatpush1.msra.mxu0 0.0
  %869 = vmatprep.subr.mxu0 0.0
  %870 = vmatpush1.msra.mxu0 0.0
  %871 = vmatprep.subr.mxu0 0.0
  %872 = vmatpush1.msra.mxu0 0.0
  %873 = vmatprep.subr.mxu0 0.0
  %874 = vmatpush1.msra.mxu0 0.0
  %875 = vmatprep.subr.mxu0 0.0
  %876 = vmatpush1.msra.mxu0 0.0
  %877 = vmatprep.subr.mxu0 0.0
  %878 = vmatpush1.msra.mxu0 0.0
  %879 = vmatprep.subr.mxu0 0.0
  %880 = vmatpush1.msra.mxu0 0.0
  %881 = vmatprep.subr.mxu0 0.0
  %882 = vmatpush1.msra.mxu0 0.0
  %883 = vmatprep.subr.mxu0 0.0
  %884 = vmatpush1.msra.mxu0 0.0
  %885 = vmatprep.subr.mxu0 0.0
  %886 = vmatpush1.msra.mxu0 0.0
  %887 = vmatprep.subr.mxu0 0.0
  %888 = vmatpush1.msra.mxu0 0.0
  %889 = vmatprep.subr.mxu0 0.0
  %890 = vmatpush1.msra.mxu0 0.0
  %891 = vmatprep.subr.mxu0 0.0
  %892 = vmatpush1.msra.mxu0 0.0
  %893 = vmatprep.subr.mxu0 0.0
  %894 = vmatpush1.msra.mxu0 0.0
  %895 = vmatprep.subr.mxu0 0.0
  %896 = vmatpush1.msra.mxu0 0.0
  %897 = vmatprep.subr.mxu0 0.0
  %898 = vmatpush1.msra.mxu0 0.0
  %899 = vmatprep.subr.mxu0 0.0
  %900 = vmatpush1.msra.mxu0 0.0
  %901 = vmatprep.subr.mxu0 0.0
  %902 = vmatpush1.msra.mxu0 0.0
  %903 = vmatprep.subr.mxu0 0.0
  %904 = vmatpush1.msra.mxu0 0.0
  %905 = vmatprep.subr.mxu0 0.0
  %906 = vmatpush1.msra.mxu0 0.0
  %907 = vmatprep.subr.mxu0 0.0
  %908 = vmatpush1.msra.mxu0 0.0
  %909 = vmatprep.subr.mxu0 0.0
  %910 = vmatpush1.msra.mxu0 0.0
  %911 = vmatprep.subr.mxu0 0.0
  %912 = vmatpush1.msra.mxu0 0.0
  %913 = vmatprep.subr.mxu0 0.0
  %914 = vmatpush1.msra.mxu0 0.0
  %915 = vmatprep.subr.mxu0 0.0
  %916 = vmatpush1.msra.mxu0 0.0
  %917 = vmatprep.subr.mxu0 0.0
  %918 = vmatpush1.msra.mxu0 0.0
  %919 = vmatprep.subr.mxu0 0.0
  %920 = vmatpush1.msra.mxu0 0.0
  %921 = vmatprep.mubr.f32.mxu0 0.0
  %922 = vmatmul.mubr.f32.gmra.mrb[0].mxu0 %v855
  %v923 = vpop.f32.mrb[0].mxu0
  %v924 = vadd.f32 %v851, %v923
  %v925 = vpop.f32.mrb[0].mxu0
  %926 = vdwg.mxu0
  %927 = vrot.lane.b32.xlu0 %v771, 7
  %v928 = vpop.permute.xlu0 %927
  %v929 = vmul.f32 %v928, %v195
  %s930 = scalar_lea.vmem %s4, 16
  %v931 = vld [vmem:[%s930] sm:$0xff]
  %v933 = vsel %vm43, %v931, 0
  %935 = vmatprep.subr.mxu0 0.0
  %936 = vmatpush1.msra.mxu0 %v929
  %937 = vmatprep.subr.mxu0 0.0
  %938 = vmatpush1.msra.mxu0 0.0
  %939 = vmatprep.subr.mxu0 0.0
  %940 = vmatpush1.msra.mxu0 0.0
  %941 = vmatprep.subr.mxu0 0.0
  %942 = vmatpush1.msra.mxu0 0.0
  %943 = vmatprep.subr.mxu0 0.0
  %944 = vmatpush1.msra.mxu0 0.0
  %945 = vmatprep.subr.mxu0 0.0
  %946 = vmatpush1.msra.mxu0 0.0
  %947 = vmatprep.subr.mxu0 0.0
  %948 = vmatpush1.msra.mxu0 0.0
  %949 = vmatprep.subr.mxu0 0.0
  %950 = vmatpush1.msra.mxu0 0.0
  %951 = vmatprep.subr.mxu0 0.0
  %952 = vmatpush1.msra.mxu0 0.0
  %953 = vmatprep.subr.mxu0 0.0
  %954 = vmatpush1.msra.mxu0 0.0
  %955 = vmatprep.subr.mxu0 0.0
  %956 = vmatpush1.msra.mxu0 0.0
  %957 = vmatprep.subr.mxu0 0.0
  %958 = vmatpush1.msra.mxu0 0.0
  %959 = vmatprep.subr.mxu0 0.0
  %960 = vmatpush1.msra.mxu0 0.0
  %961 = vmatprep.subr.mxu0 0.0
  %962 = vmatpush1.msra.mxu0 0.0
  %963 = vmatprep.subr.mxu0 0.0
  %964 = vmatpush1.msra.mxu0 0.0
  %965 = vmatprep.subr.mxu0 0.0
  %966 = vmatpush1.msra.mxu0 0.0
  %967 = vmatprep.subr.mxu0 0.0
  %968 = vmatpush1.msra.mxu0 0.0
  %969 = vmatprep.subr.mxu0 0.0
  %970 = vmatpush1.msra.mxu0 0.0
  %971 = vmatprep.subr.mxu0 0.0
  %972 = vmatpush1.msra.mxu0 0.0
  %973 = vmatprep.subr.mxu0 0.0
  %974 = vmatpush1.msra.mxu0 0.0
  %975 = vmatprep.subr.mxu0 0.0
  %976 = vmatpush1.msra.mxu0 0.0
  %977 = vmatprep.subr.mxu0 0.0
  %978 = vmatpush1.msra.mxu0 0.0
  %979 = vmatprep.subr.mxu0 0.0
  %980 = vmatpush1.msra.mxu0 0.0
  %981 = vmatprep.subr.mxu0 0.0
  %982 = vmatpush1.msra.mxu0 0.0
  %983 = vmatprep.subr.mxu0 0.0
  %984 = vmatpush1.msra.mxu0 0.0
  %985 = vmatprep.subr.mxu0 0.0
  %986 = vmatpush1.msra.mxu0 0.0
  %987 = vmatprep.subr.mxu0 0.0
  %988 = vmatpush1.msra.mxu0 0.0
  %989 = vmatprep.subr.mxu0 0.0
  %990 = vmatpush1.msra.mxu0 0.0
  %991 = vmatprep.subr.mxu0 0.0
  %992 = vmatpush1.msra.mxu0 0.0
  %993 = vmatprep.subr.mxu0 0.0
  %994 = vmatpush1.msra.mxu0 0.0
  %995 = vmatprep.subr.mxu0 0.0
  %996 = vmatpush1.msra.mxu0 0.0
  %997 = vmatprep.subr.mxu0 0.0
  %998 = vmatpush1.msra.mxu0 0.0
  %999 = vmatprep.mubr.f32.mxu0 0.0
  %1000 = vmatmul.mubr.f32.gmra.mrb[0].mxu0 %v933
  %v1001 = vpop.f32.mrb[0].mxu0
  %v1002 = vadd.f32 0.0, %v1001
  %v1003 = vpop.f32.mrb[0].mxu0
  %1004 = vdwg.mxu0
  %v1005 = vadd.f32 %v924, %v1002
  %1006 = vrot.lane.b32.xlu0 %v771, 1
  %v1007 = vpop.permute.xlu0 %1006
  %v1008 = vmul.f32 %v1007, %v278
  %s1009 = scalar_lea.vmem %s4, 24
  %v1010 = vld [vmem:[%s1009] sm:$0xff]
  %v1012 = vsel %vm43, %v1010, 0
  %1014 = vmatprep.subr.mxu0 0.0
  %1015 = vmatpush1.msra.mxu0 %v1008
  %1016 = vmatprep.subr.mxu0 0.0
  %1017 = vmatpush1.msra.mxu0 0.0
  %1018 = vmatprep.subr.mxu0 0.0
  %1019 = vmatpush1.msra.mxu0 0.0
  %1020 = vmatprep.subr.mxu0 0.0
  %1021 = vmatpush1.msra.mxu0 0.0
  %1022 = vmatprep.subr.mxu0 0.0
  %1023 = vmatpush1.msra.mxu0 0.0
  %1024 = vmatprep.subr.mxu0 0.0
  %1025 = vmatpush1.msra.mxu0 0.0
  %1026 = vmatprep.subr.mxu0 0.0
  %1027 = vmatpush1.msra.mxu0 0.0
  %1028 = vmatprep.subr.mxu0 0.0
  %1029 = vmatpush1.msra.mxu0 0.0
  %1030 = vmatprep.subr.mxu0 0.0
  %1031 = vmatpush1.msra.mxu0 0.0
  %1032 = vmatprep.subr.mxu0 0.0
  %1033 = vmatpush1.msra.mxu0 0.0
  %1034 = vmatprep.subr.mxu0 0.0
  %1035 = vmatpush1.msra.mxu0 0.0
  %1036 = vmatprep.subr.mxu0 0.0
  %1037 = vmatpush1.msra.mxu0 0.0
  %1038 = vmatprep.subr.mxu0 0.0
  %1039 = vmatpush1.msra.mxu0 0.0
  %1040 = vmatprep.subr.mxu0 0.0
  %1041 = vmatpush1.msra.mxu0 0.0
  %1042 = vmatprep.subr.mxu0 0.0
  %1043 = vmatpush1.msra.mxu0 0.0
  %1044 = vmatprep.subr.mxu0 0.0
  %1045 = vmatpush1.msra.mxu0 0.0
  %1046 = vmatprep.subr.mxu0 0.0
  %1047 = vmatpush1.msra.mxu0 0.0
  %1048 = vmatprep.subr.mxu0 0.0
  %1049 = vmatpush1.msra.mxu0 0.0
  %1050 = vmatprep.subr.mxu0 0.0
  %1051 = vmatpush1.msra.mxu0 0.0
  %1052 = vmatprep.subr.mxu0 0.0
  %1053 = vmatpush1.msra.mxu0 0.0
  %1054 = vmatprep.subr.mxu0 0.0
  %1055 = vmatpush1.msra.mxu0 0.0
  %1056 = vmatprep.subr.mxu0 0.0
  %1057 = vmatpush1.msra.mxu0 0.0
  %1058 = vmatprep.subr.mxu0 0.0
  %1059 = vmatpush1.msra.mxu0 0.0
  %1060 = vmatprep.subr.mxu0 0.0
  %1061 = vmatpush1.msra.mxu0 0.0
  %1062 = vmatprep.subr.mxu0 0.0
  %1063 = vmatpush1.msra.mxu0 0.0
  %1064 = vmatprep.subr.mxu0 0.0
  %1065 = vmatpush1.msra.mxu0 0.0
  %1066 = vmatprep.subr.mxu0 0.0
  %1067 = vmatpush1.msra.mxu0 0.0
  %1068 = vmatprep.subr.mxu0 0.0
  %1069 = vmatpush1.msra.mxu0 0.0
  %1070 = vmatprep.subr.mxu0 0.0
  %1071 = vmatpush1.msra.mxu0 0.0
  %1072 = vmatprep.subr.mxu0 0.0
  %1073 = vmatpush1.msra.mxu0 0.0
  %1074 = vmatprep.subr.mxu0 0.0
  %1075 = vmatpush1.msra.mxu0 0.0
  %1076 = vmatprep.subr.mxu0 0.0
  %1077 = vmatpush1.msra.mxu0 0.0
  %1078 = vmatprep.mubr.f32.mxu0 0.0
  %1079 = vmatmul.mubr.f32.gmra.mrb[0].mxu0 %v1012
  %v1080 = vpop.f32.mrb[0].mxu0
  %v1081 = vadd.f32 0.0, %v1080
  %v1082 = vpop.f32.mrb[0].mxu0
  %1083 = vdwg.mxu0
  %v1084 = vadd.f32 %v1005, %v1081
  %s1085 = scalar_lea.vmem %s4, 32
  %v1086 = vld [vmem:[%s1085] sm:$0xff]
  %v1088 = vsel %vm43, %v1086, 0
  %1090 = vmatprep.subr.mxu0 0.0
  %1091 = vmatpush1.msra.mxu0 %v771
  %1092 = vmatprep.subr.mxu0 0.0
  %1093 = vmatpush1.msra.mxu0 0.0
  %1094 = vmatprep.subr.mxu0 0.0
  %1095 = vmatpush1.msra.mxu0 0.0
  %1096 = vmatprep.subr.mxu0 0.0
  %1097 = vmatpush1.msra.mxu0 0.0
  %1098 = vmatprep.subr.mxu0 0.0
  %1099 = vmatpush1.msra.mxu0 0.0
  %1100 = vmatprep.subr.mxu0 0.0
  %1101 = vmatpush1.msra.mxu0 0.0
  %1102 = vmatprep.subr.mxu0 0.0
  %1103 = vmatpush1.msra.mxu0 0.0
  %1104 = vmatprep.subr.mxu0 0.0
  %1105 = vmatpush1.msra.mxu0 0.0
  %1106 = vmatprep.subr.mxu0 0.0
  %1107 = vmatpush1.msra.mxu0 0.0
  %1108 = vmatprep.subr.mxu0 0.0
  %1109 = vmatpush1.msra.mxu0 0.0
  %1110 = vmatprep.subr.mxu0 0.0
  %1111 = vmatpush1.msra.mxu0 0.0
  %1112 = vmatprep.subr.mxu0 0.0
  %1113 = vmatpush1.msra.mxu0 0.0
  %1114 = vmatprep.subr.mxu0 0.0
  %1115 = vmatpush1.msra.mxu0 0.0
  %1116 = vmatprep.subr.mxu0 0.0
  %1117 = vmatpush1.msra.mxu0 0.0
  %1118 = vmatprep.subr.mxu0 0.0
  %1119 = vmatpush1.msra.mxu0 0.0
  %1120 = vmatprep.subr.mxu0 0.0
  %1121 = vmatpush1.msra.mxu0 0.0
  %1122 = vmatprep.subr.mxu0 0.0
  %1123 = vmatpush1.msra.mxu0 0.0
  %1124 = vmatprep.subr.mxu0 0.0
  %1125 = vmatpush1.msra.mxu0 0.0
  %1126 = vmatprep.subr.mxu0 0.0
  %1127 = vmatpush1.msra.mxu0 0.0
  %1128 = vmatprep.subr.mxu0 0.0
  %1129 = vmatpush1.msra.mxu0 0.0
  %1130 = vmatprep.subr.mxu0 0.0
  %1131 = vmatpush1.msra.mxu0 0.0
  %1132 = vmatprep.subr.mxu0 0.0
  %1133 = vmatpush1.msra.mxu0 0.0
  %1134 = vmatprep.subr.mxu0 0.0
  %1135 = vmatpush1.msra.mxu0 0.0
  %1136 = vmatprep.subr.mxu0 0.0
  %1137 = vmatpush1.msra.mxu0 0.0
  %1138 = vmatprep.subr.mxu0 0.0
  %1139 = vmatpush1.msra.mxu0 0.0
  %1140 = vmatprep.subr.mxu0 0.0
  %1141 = vmatpush1.msra.mxu0 0.0
  %1142 = vmatprep.subr.mxu0 0.0
  %1143 = vmatpush1.msra.mxu0 0.0
  %1144 = vmatprep.subr.mxu0 0.0
  %1145 = vmatpush1.msra.mxu0 0.0
  %1146 = vmatprep.subr.mxu0 0.0
  %1147 = vmatpush1.msra.mxu0 0.0
  %1148 = vmatprep.subr.mxu0 0.0
  %1149 = vmatpush1.msra.mxu0 0.0
  %1150 = vmatprep.subr.mxu0 0.0
  %1151 = vmatpush1.msra.mxu0 0.0
  %1152 = vmatprep.subr.mxu0 0.0
  %1153 = vmatpush1.msra.mxu0 0.0
  %1154 = vmatprep.mubr.f32.mxu0 0.0
  %1155 = vmatmul.mubr.f32.gmra.mrb[0].mxu0 %v1088
  %v1156 = vpop.f32.mrb[0].mxu0
  %v1157 = vadd.f32 0.0, %v1156
  %v1158 = vpop.f32.mrb[0].mxu0
  %1159 = vdwg.mxu0
  %v1160 = vadd.f32 %v1084, %v1157
  %1161 = vrot.lane.b32.xlu0 %v771, 127
  %v1162 = vpop.permute.xlu0 %1161
  %v1163 = vmul.f32 %v1162, %v437
  %s1164 = scalar_lea.vmem %s4, 40
  %v1165 = vld [vmem:[%s1164] sm:$0xff]
  %v1167 = vsel %vm43, %v1165, 0
  %1169 = vmatprep.subr.mxu0 0.0
  %1170 = vmatpush1.msra.mxu0 %v1163
  %1171 = vmatprep.subr.mxu0 0.0
  %1172 = vmatpush1.msra.mxu0 0.0
  %1173 = vmatprep.subr.mxu0 0.0
  %1174 = vmatpush1.msra.mxu0 0.0
  %1175 = vmatprep.subr.mxu0 0.0
  %1176 = vmatpush1.msra.mxu0 0.0
  %1177 = vmatprep.subr.mxu0 0.0
  %1178 = vmatpush1.msra.mxu0 0.0
  %1179 = vmatprep.subr.mxu0 0.0
  %1180 = vmatpush1.msra.mxu0 0.0
  %1181 = vmatprep.subr.mxu0 0.0
  %1182 = vmatpush1.msra.mxu0 0.0
  %1183 = vmatprep.subr.mxu0 0.0
  %1184 = vmatpush1.msra.mxu0 0.0
  %1185 = vmatprep.subr.mxu0 0.0
  %1186 = vmatpush1.msra.mxu0 0.0
  %1187 = vmatprep.subr.mxu0 0.0
  %1188 = vmatpush1.msra.mxu0 0.0
  %1189 = vmatprep.subr.mxu0 0.0
  %1190 = vmatpush1.msra.mxu0 0.0
  %1191 = vmatprep.subr.mxu0 0.0
  %1192 = vmatpush1.msra.mxu0 0.0
  %1193 = vmatprep.subr.mxu0 0.0
  %1194 = vmatpush1.msra.mxu0 0.0
  %1195 = vmatprep.subr.mxu0 0.0
  %1196 = vmatpush1.msra.mxu0 0.0
  %1197 = vmatprep.subr.mxu0 0.0
  %1198 = vmatpush1.msra.mxu0 0.0
  %1199 = vmatprep.subr.mxu0 0.0
  %1200 = vmatpush1.msra.mxu0 0.0
  %1201 = vmatprep.subr.mxu0 0.0
  %1202 = vmatpush1.msra.mxu0 0.0
  %1203 = vmatprep.subr.mxu0 0.0
  %1204 = vmatpush1.msra.mxu0 0.0
  %1205 = vmatprep.subr.mxu0 0.0
  %1206 = vmatpush1.msra.mxu0 0.0
  %1207 = vmatprep.subr.mxu0 0.0
  %1208 = vmatpush1.msra.mxu0 0.0
  %1209 = vmatprep.subr.mxu0 0.0
  %1210 = vmatpush1.msra.mxu0 0.0
  %1211 = vmatprep.subr.mxu0 0.0
  %1212 = vmatpush1.msra.mxu0 0.0
  %1213 = vmatprep.subr.mxu0 0.0
  %1214 = vmatpush1.msra.mxu0 0.0
  %1215 = vmatprep.subr.mxu0 0.0
  %1216 = vmatpush1.msra.mxu0 0.0
  %1217 = vmatprep.subr.mxu0 0.0
  %1218 = vmatpush1.msra.mxu0 0.0
  %1219 = vmatprep.subr.mxu0 0.0
  %1220 = vmatpush1.msra.mxu0 0.0
  %1221 = vmatprep.subr.mxu0 0.0
  %1222 = vmatpush1.msra.mxu0 0.0
  %1223 = vmatprep.subr.mxu0 0.0
  %1224 = vmatpush1.msra.mxu0 0.0
  %1225 = vmatprep.subr.mxu0 0.0
  %1226 = vmatpush1.msra.mxu0 0.0
  %1227 = vmatprep.subr.mxu0 0.0
  %1228 = vmatpush1.msra.mxu0 0.0
  %1229 = vmatprep.subr.mxu0 0.0
  %1230 = vmatpush1.msra.mxu0 0.0
  %1231 = vmatprep.subr.mxu0 0.0
  %1232 = vmatpush1.msra.mxu0 0.0
  %1233 = vmatprep.mubr.f32.mxu0 0.0
  %1234 = vmatmul.mubr.f32.gmra.mrb[0].mxu0 %v1167
  %v1235 = vpop.f32.mrb[0].mxu0
  %v1236 = vadd.f32 0.0, %v1235
  %v1237 = vpop.f32.mrb[0].mxu0
  %1238 = vdwg.mxu0
  %v1239 = vadd.f32 %v1160, %v1236
  %1240 = vrot.lane.b32.xlu0 %v771, 121
  %v1241 = vpop.permute.xlu0 %1240
  %v1242 = vmul.f32 %v1241, %v520
  %s1243 = scalar_lea.vmem %s4, 48
  %v1244 = vld [vmem:[%s1243] sm:$0xff]
  %v1246 = vsel %vm43, %v1244, 0
  %1248 = vmatprep.subr.mxu0 0.0
  %1249 = vmatpush1.msra.mxu0 %v1242
  %1250 = vmatprep.subr.mxu0 0.0
  %1251 = vmatpush1.msra.mxu0 0.0
  %1252 = vmatprep.subr.mxu0 0.0
  %1253 = vmatpush1.msra.mxu0 0.0
  %1254 = vmatprep.subr.mxu0 0.0
  %1255 = vmatpush1.msra.mxu0 0.0
  %1256 = vmatprep.subr.mxu0 0.0
  %1257 = vmatpush1.msra.mxu0 0.0
  %1258 = vmatprep.subr.mxu0 0.0
  %1259 = vmatpush1.msra.mxu0 0.0
  %1260 = vmatprep.subr.mxu0 0.0
  %1261 = vmatpush1.msra.mxu0 0.0
  %1262 = vmatprep.subr.mxu0 0.0
  %1263 = vmatpush1.msra.mxu0 0.0
  %1264 = vmatprep.subr.mxu0 0.0
  %1265 = vmatpush1.msra.mxu0 0.0
  %1266 = vmatprep.subr.mxu0 0.0
  %1267 = vmatpush1.msra.mxu0 0.0
  %1268 = vmatprep.subr.mxu0 0.0
  %1269 = vmatpush1.msra.mxu0 0.0
  %1270 = vmatprep.subr.mxu0 0.0
  %1271 = vmatpush1.msra.mxu0 0.0
  %1272 = vmatprep.subr.mxu0 0.0
  %1273 = vmatpush1.msra.mxu0 0.0
  %1274 = vmatprep.subr.mxu0 0.0
  %1275 = vmatpush1.msra.mxu0 0.0
  %1276 = vmatprep.subr.mxu0 0.0
  %1277 = vmatpush1.msra.mxu0 0.0
  %1278 = vmatprep.subr.mxu0 0.0
  %1279 = vmatpush1.msra.mxu0 0.0
  %1280 = vmatprep.subr.mxu0 0.0
  %1281 = vmatpush1.msra.mxu0 0.0
  %1282 = vmatprep.subr.mxu0 0.0
  %1283 = vmatpush1.msra.mxu0 0.0
  %1284 = vmatprep.subr.mxu0 0.0
  %1285 = vmatpush1.msra.mxu0 0.0
  %1286 = vmatprep.subr.mxu0 0.0
  %1287 = vmatpush1.msra.mxu0 0.0
  %1288 = vmatprep.subr.mxu0 0.0
  %1289 = vmatpush1.msra.mxu0 0.0
  %1290 = vmatprep.subr.mxu0 0.0
  %1291 = vmatpush1.msra.mxu0 0.0
  %1292 = vmatprep.subr.mxu0 0.0
  %1293 = vmatpush1.msra.mxu0 0.0
  %1294 = vmatprep.subr.mxu0 0.0
  %1295 = vmatpush1.msra.mxu0 0.0
  %1296 = vmatprep.subr.mxu0 0.0
  %1297 = vmatpush1.msra.mxu0 0.0
  %1298 = vmatprep.subr.mxu0 0.0
  %1299 = vmatpush1.msra.mxu0 0.0
  %1300 = vmatprep.subr.mxu0 0.0
  %1301 = vmatpush1.msra.mxu0 0.0
  %1302 = vmatprep.subr.mxu0 0.0
  %1303 = vmatpush1.msra.mxu0 0.0
  %1304 = vmatprep.subr.mxu0 0.0
  %1305 = vmatpush1.msra.mxu0 0.0
  %1306 = vmatprep.subr.mxu0 0.0
  %1307 = vmatpush1.msra.mxu0 0.0
  %1308 = vmatprep.subr.mxu0 0.0
  %1309 = vmatpush1.msra.mxu0 0.0
  %1310 = vmatprep.subr.mxu0 0.0
  %1311 = vmatpush1.msra.mxu0 0.0
  %1312 = vmatprep.mubr.f32.mxu0 0.0
  %1313 = vmatmul.mubr.f32.gmra.mrb[0].mxu0 %v1246
  %v1314 = vpop.f32.mrb[0].mxu0
  %v1315 = vadd.f32 0.0, %v1314
  %v1316 = vpop.f32.mrb[0].mxu0
  %1317 = vdwg.mxu0
  %v1318 = vadd.f32 %v1239, %v1315
  %1319 = vrot.lane.b32.xlu0 %v771, 120
  %v1320 = vpop.permute.xlu0 %1319
  %v1321 = vmul.f32 %v1320, %v603
  %s1322 = scalar_lea.vmem %s4, 56
  %v1323 = vld [vmem:[%s1322] sm:$0xff]
  %v1325 = vsel %vm43, %v1323, 0
  %1327 = vmatprep.subr.mxu0 0.0
  %1328 = vmatpush1.msra.mxu0 %v1321
  %1329 = vmatprep.subr.mxu0 0.0
  %1330 = vmatpush1.msra.mxu0 0.0
  %1331 = vmatprep.subr.mxu0 0.0
  %1332 = vmatpush1.msra.mxu0 0.0
  %1333 = vmatprep.subr.mxu0 0.0
  %1334 = vmatpush1.msra.mxu0 0.0
  %1335 = vmatprep.subr.mxu0 0.0
  %1336 = vmatpush1.msra.mxu0 0.0
  %1337 = vmatprep.subr.mxu0 0.0
  %1338 = vmatpush1.msra.mxu0 0.0
  %1339 = vmatprep.subr.mxu0 0.0
  %1340 = vmatpush1.msra.mxu0 0.0
  %1341 = vmatprep.subr.mxu0 0.0
  %1342 = vmatpush1.msra.mxu0 0.0
  %1343 = vmatprep.subr.mxu0 0.0
  %1344 = vmatpush1.msra.mxu0 0.0
  %1345 = vmatprep.subr.mxu0 0.0
  %1346 = vmatpush1.msra.mxu0 0.0
  %1347 = vmatprep.subr.mxu0 0.0
  %1348 = vmatpush1.msra.mxu0 0.0
  %1349 = vmatprep.subr.mxu0 0.0
  %1350 = vmatpush1.msra.mxu0 0.0
  %1351 = vmatprep.subr.mxu0 0.0
  %1352 = vmatpush1.msra.mxu0 0.0
  %1353 = vmatprep.subr.mxu0 0.0
  %1354 = vmatpush1.msra.mxu0 0.0
  %1355 = vmatprep.subr.mxu0 0.0
  %1356 = vmatpush1.msra.mxu0 0.0
  %1357 = vmatprep.subr.mxu0 0.0
  %1358 = vmatpush1.msra.mxu0 0.0
  %1359 = vmatprep.subr.mxu0 0.0
  %1360 = vmatpush1.msra.mxu0 0.0
  %1361 = vmatprep.subr.mxu0 0.0
  %1362 = vmatpush1.msra.mxu0 0.0
  %1363 = vmatprep.subr.mxu0 0.0
  %1364 = vmatpush1.msra.mxu0 0.0
  %1365 = vmatprep.subr.mxu0 0.0
  %1366 = vmatpush1.msra.mxu0 0.0
  %1367 = vmatprep.subr.mxu0 0.0
  %1368 = vmatpush1.msra.mxu0 0.0
  %1369 = vmatprep.subr.mxu0 0.0
  %1370 = vmatpush1.msra.mxu0 0.0
  %1371 = vmatprep.subr.mxu0 0.0
  %1372 = vmatpush1.msra.mxu0 0.0
  %1373 = vmatprep.subr.mxu0 0.0
  %1374 = vmatpush1.msra.mxu0 0.0
  %1375 = vmatprep.subr.mxu0 0.0
  %1376 = vmatpush1.msra.mxu0 0.0
  %1377 = vmatprep.subr.mxu0 0.0
  %1378 = vmatpush1.msra.mxu0 0.0
  %1379 = vmatprep.subr.mxu0 0.0
  %1380 = vmatpush1.msra.mxu0 0.0
  %1381 = vmatprep.subr.mxu0 0.0
  %1382 = vmatpush1.msra.mxu0 0.0
  %1383 = vmatprep.subr.mxu0 0.0
  %1384 = vmatpush1.msra.mxu0 0.0
  %1385 = vmatprep.subr.mxu0 0.0
  %1386 = vmatpush1.msra.mxu0 0.0
  %1387 = vmatprep.subr.mxu0 0.0
  %1388 = vmatpush1.msra.mxu0 0.0
  %1389 = vmatprep.subr.mxu0 0.0
  %1390 = vmatpush1.msra.mxu0 0.0
  %1391 = vmatprep.mubr.f32.mxu0 0.0
  %1392 = vmatmul.mubr.f32.gmra.mrb[0].mxu0 %v1325
  %v1393 = vpop.f32.mrb[0].mxu0
  %v1394 = vadd.f32 0.0, %v1393
  %v1395 = vpop.f32.mrb[0].mxu0
  %1396 = vdwg.mxu0
  %v1397 = vadd.f32 %v1318, %v1394
  %1398 = vrot.lane.b32.xlu0 %v771, 119
  %v1399 = vpop.permute.xlu0 %1398
  %v1400 = vmul.f32 %v1399, %v686
  %s1401 = scalar_lea.vmem %s4, 64
  %v1402 = vld [vmem:[%s1401] sm:$0xff]
  %v1404 = vsel %vm43, %v1402, 0
  %1406 = vmatprep.subr.mxu0 0.0
  %1407 = vmatpush1.msra.mxu0 %v1400
  %1408 = vmatprep.subr.mxu0 0.0
  %1409 = vmatpush1.msra.mxu0 0.0
  %1410 = vmatprep.subr.mxu0 0.0
  %1411 = vmatpush1.msra.mxu0 0.0
  %1412 = vmatprep.subr.mxu0 0.0
  %1413 = vmatpush1.msra.mxu0 0.0
  %1414 = vmatprep.subr.mxu0 0.0
  %1415 = vmatpush1.msra.mxu0 0.0
  %1416 = vmatprep.subr.mxu0 0.0
  %1417 = vmatpush1.msra.mxu0 0.0
  %1418 = vmatprep.subr.mxu0 0.0
  %1419 = vmatpush1.msra.mxu0 0.0
  %1420 = vmatprep.subr.mxu0 0.0
  %1421 = vmatpush1.msra.mxu0 0.0
  %1422 = vmatprep.subr.mxu0 0.0
  %1423 = vmatpush1.msra.mxu0 0.0
  %1424 = vmatprep.subr.mxu0 0.0
  %1425 = vmatpush1.msra.mxu0 0.0
  %1426 = vmatprep.subr.mxu0 0.0
  %1427 = vmatpush1.msra.mxu0 0.0
  %1428 = vmatprep.subr.mxu0 0.0
  %1429 = vmatpush1.msra.mxu0 0.0
  %1430 = vmatprep.subr.mxu0 0.0
  %1431 = vmatpush1.msra.mxu0 0.0
  %1432 = vmatprep.subr.mxu0 0.0
  %1433 = vmatpush1.msra.mxu0 0.0
  %1434 = vmatprep.subr.mxu0 0.0
  %1435 = vmatpush1.msra.mxu0 0.0
  %1436 = vmatprep.subr.mxu0 0.0
  %1437 = vmatpush1.msra.mxu0 0.0
  %1438 = vmatprep.subr.mxu0 0.0
  %1439 = vmatpush1.msra.mxu0 0.0
  %1440 = vmatprep.subr.mxu0 0.0
  %1441 = vmatpush1.msra.mxu0 0.0
  %1442 = vmatprep.subr.mxu0 0.0
  %1443 = vmatpush1.msra.mxu0 0.0
  %1444 = vmatprep.subr.mxu0 0.0
  %1445 = vmatpush1.msra.mxu0 0.0
  %1446 = vmatprep.subr.mxu0 0.0
  %1447 = vmatpush1.msra.mxu0 0.0
  %1448 = vmatprep.subr.mxu0 0.0
  %1449 = vmatpush1.msra.mxu0 0.0
  %1450 = vmatprep.subr.mxu0 0.0
  %1451 = vmatpush1.msra.mxu0 0.0
  %1452 = vmatprep.subr.mxu0 0.0
  %1453 = vmatpush1.msra.mxu0 0.0
  %1454 = vmatprep.subr.mxu0 0.0
  %1455 = vmatpush1.msra.mxu0 0.0
  %1456 = vmatprep.subr.mxu0 0.0
  %1457 = vmatpush1.msra.mxu0 0.0
  %1458 = vmatprep.subr.mxu0 0.0
  %1459 = vmatpush1.msra.mxu0 0.0
  %1460 = vmatprep.subr.mxu0 0.0
  %1461 = vmatpush1.msra.mxu0 0.0
  %1462 = vmatprep.subr.mxu0 0.0
  %1463 = vmatpush1.msra.mxu0 0.0
  %1464 = vmatprep.subr.mxu0 0.0
  %1465 = vmatpush1.msra.mxu0 0.0
  %1466 = vmatprep.subr.mxu0 0.0
  %1467 = vmatpush1.msra.mxu0 0.0
  %1468 = vmatprep.subr.mxu0 0.0
  %1469 = vmatpush1.msra.mxu0 0.0
  %1470 = vmatprep.mubr.f32.mxu0 0.0
  %1471 = vmatmul.mubr.f32.gmra.mrb[0].mxu0 %v1404
  %v1472 = vpop.f32.mrb[0].mxu0
  %v1473 = vadd.f32 0.0, %v1472
  %v1474 = vpop.f32.mrb[0].mxu0
  %1475 = vdwg.mxu0
  %v1476 = vadd.f32 %v1397, %v1473
  %v1477 = vld [vmem:[%s5] sm:$0xff]
  %1479 = vset.pattern.permute.xlu0 0
  %1480 = vperm.xlu0 %1479, %v1477
  %v1481 = vpop.permute.xlu0 %1480
  %v1483 = vadd.f32 %v1476, %v1481
  %v1484 = vmax.f32 %v1483, 0.0
  %1485 = vst [vmem:[%s6] sm:$0xff] %v1484
  // Predicated region
  $region26: #{apply.1} parent=0 // pred_check
    _
  $region27: #{apply.1} parent=0 // pred_check_branch
    %1487 = sbr.rel (0) target = $region29
  $region28: #{apply.1} parent=0 // pred_region
    _
  $region29: #{apply.1} parent=0 // pred_fallthru
    _
  // Predicated region
  $region30: #{apply.1} parent=0 // pred_check
    _
  $region31: #{apply.1} parent=0 // pred_check_branch
    %1489 = sbr.rel (0) target = $region33
  $region32: #{apply.1} parent=0 // pred_region
    _
  $region33: #{apply.1} parent=0 // pred_fallthru
    _

</llo_original>
